<compile_context>
chip_gen: v5e
topology: v5e:2x2
jax: 0.10.0
libtpu: 0.0.40
codegen_flags: <defaults>
</compile_context>

<pallas_src>
import functools

import jax
import jax.numpy as jnp
from jax.experimental import pallas as pl
from jax.experimental.pallas import tpu as pltpu

THRESHOLD = 1.0  # snntorch default neuron threshold


def _spiking_rnn_kernel(beta_ref,                   # SMEM (1,1), pre-clamped to [0,1]
                        x_ref,                      # VMEM (B, TT, I) batch-major time block
                        w_in_ref, b_in_ref,         # (I, H), (1, H)
                        w_rec_ref,                  # (H, H)
                        w_out_ref, b_out_ref,       # (H, O), (1, O)
                        prob_ref,                   # out: (B, O)
                        spk_rec_ref, mem_rec_ref,   # out: (B, TT, H) each
                        spk_sc, mem_sc, sum_sc,     # scratch: (B, H) each
                        *, tt_block, n_int, start_integration):
    tb = pl.program_id(0)
    n_blocks = pl.num_programs(0)

    @pl.when(tb == 0)
    def _():
        # mem_reset(zeros) -> reset=0, mem starts at 0; spk / spike-sum start at 0.
        spk_sc[...] = jnp.zeros_like(spk_sc)
        mem_sc[...] = jnp.zeros_like(mem_sc)
        sum_sc[...] = jnp.zeros_like(sum_sc)
        prob_ref[...] = jnp.zeros_like(prob_ref)   # explicit init (robust to pipeline changes)

    beta = beta_ref[0, 0]

    # Loop-invariant VMEM loads hoisted out of the unrolled time loop.
    w_rec = w_rec_ref[...]

    # Input projection for the whole time block: a single MXU matmul (no serial dependency),
    # so only spk @ W_rec remains inside the serial recurrence.
    B, TT, I = x_ref.shape
    x_blk = x_ref[...].reshape(B * TT, I)
    cur_blk = (jnp.dot(x_blk, w_in_ref[...], preferred_element_type=jnp.float32)
               + b_in_ref[...]).reshape(B, TT, -1)                        # (B, TT, H)

    # State lives in registers across the TT unrolled steps; scratch only at block edges.
    spk = spk_sc[...]
    mem = mem_sc[...]
    spk_sum = sum_sc[...]

    # Recurrence forces serial time; statically unroll TT steps per grid iteration
    # to amortize per-grid-step overhead and keep DMA blocks lane/sublane-dense.
    for tt in range(tt_block):
        cur = cur_blk[:, tt, :] + jnp.dot(spk, w_rec,
                                          preferred_element_type=jnp.float32)
        reset = (mem - THRESHOLD > 0.0).astype(jnp.float32)     # Heaviside of previous mem
        mem = beta * mem + cur - reset * THRESHOLD              # reset_mechanism="subtract"
        spk = (mem - THRESHOLD > 0.0).astype(jnp.float32)       # fast_sigmoid fwd == Heaviside
        spk_rec_ref[:, tt, :] = spk
        mem_rec_ref[:, tt, :] = mem
        if start_integration <= 0:
            spk_sum = spk_sum + spk
        else:
            t_glob = tb * tt_block + tt
            spk_sum = spk_sum + jnp.where(t_glob >= start_integration, spk, 0.0)

    spk_sc[...] = spk
    mem_sc[...] = mem
    sum_sc[...] = spk_sum

    @pl.when(tb == n_blocks - 1)
    def _():
        # Readout hoisted out of the time loop (linear => sum commutes):
        #   out = sum_{t >= start} (spk_t @ W_out + b_out) = spk_sum @ W_out + n_int * b_out
        out = (jnp.dot(spk_sum, w_out_ref[...], preferred_element_type=jnp.float32)
               + float(n_int) * b_out_ref[...])
        m = jnp.max(out, axis=1, keepdims=True)
        e = jnp.exp(out - m)
        prob_ref[...] = e / jnp.sum(e, axis=1, keepdims=True)   # softmax(dim=1)


def spiking_rnn_forward(x, params, start_integration=0, time_block=8):
    """x: (B, T, I) float32.  Returns (softmax_out (B,O), spk_rec (B,T,H), mem_rec (B,T,H))."""
    B, T, I = x.shape
    H = params["w_in"].shape[1]
    O = params["w_out"].shape[1]

    # Pick the largest time block <= time_block that divides T.
    TT = min(time_block, T)
    while T % TT != 0:
        TT -= 1

    # beta clamp hoisted out of the kernel (Leaky uses beta.clamp(0,1)).
    beta = jnp.clip(params["beta"], 0.0, 1.0).reshape(1, 1).astype(jnp.float32)
    # Number of integrated steps (static) for the hoisted bias term.
    n_int = sum(1 for t in range(T) if t >= start_integration)

    kernel = functools.partial(_spiking_rnn_kernel, tt_block=TT, n_int=n_int,
                               start_integration=start_integration)

    prob, spk_rec, mem_rec = pl.pallas_call(
        kernel,
        out_shape=(
            jax.ShapeDtypeStruct((B, O), jnp.float32),
            jax.ShapeDtypeStruct((B, T, H), jnp.float32),   # batch-major, no wrapper transpose
            jax.ShapeDtypeStruct((B, T, H), jnp.float32),
        ),
        grid_spec=pltpu.PrefetchScalarGridSpec(
            num_scalar_prefetch=0,
            grid=(T // TT,),
            in_specs=[
                pl.BlockSpec(memory_space=pltpu.MemorySpace.SMEM),      # beta scalar
                pl.BlockSpec((B, TT, I), lambda tb: (0, tb, 0)),        # x time block (batch-major)
                pl.BlockSpec((I, H), lambda tb: (0, 0)),                # W_in (pre-transposed)
                pl.BlockSpec((1, H), lambda tb: (0, 0)),                # b_in
                pl.BlockSpec((H, H), lambda tb: (0, 0)),                # W_rec
                pl.BlockSpec((H, O), lambda tb: (0, 0)),                # W_out (pre-transposed)
                pl.BlockSpec((1, O), lambda tb: (0, 0)),                # b_out
            ],
            out_specs=[
                pl.BlockSpec((B, O), lambda tb: (0, 0)),                # softmax(out)
                pl.BlockSpec((B, TT, H), lambda tb: (0, tb, 0)),        # spk_rec block
                pl.BlockSpec((B, TT, H), lambda tb: (0, tb, 0)),        # mem_rec block
            ],
            scratch_shapes=[
                pltpu.VMEM((B, H), jnp.float32),   # spk state (carried across blocks)
                pltpu.VMEM((B, H), jnp.float32),   # mem state
                pltpu.VMEM((B, H), jnp.float32),   # spike-sum for hoisted readout
            ],
        ),
        compiler_params=pltpu.CompilerParams(dimension_semantics=("arbitrary",)),
    )(beta, x.astype(jnp.float32), params["w_in"], params["b_in"],
      params["w_rec"], params["w_out"], params["b_out"])

    return prob, spk_rec, mem_rec


def init_params(key, input_size, hidden_size, output_size, beta=1.0):
    """Deterministic init mimicking torch.nn.Linear (uniform +/-1/sqrt(fan_in)).
    Weights are stored already transposed ((in, out)) for the kernel's x @ W layout."""
    k1, k2, k3, k4, k5 = jax.random.split(key, 5)

    def lin_w(k, fan_in, fan_out):
        bound = 1.0 / jnp.sqrt(fan_in)
        return jax.random.uniform(k, (fan_in, fan_out), jnp.float32, -bound, bound)

    def lin_b(k, fan_in, fan_out):
        bound = 1.0 / jnp.sqrt(fan_in)
        return jax.random.uniform(k, (1, fan_out), jnp.float32, -bound, bound)

    return {
        "w_in": lin_w(k1, input_size, hidden_size),
        "b_in": lin_b(k2, input_size, hidden_size),
        "w_rec": lin_w(k3, hidden_size, hidden_size),   # bias=False in the module
        "w_out": lin_w(k4, hidden_size, output_size),
        "b_out": lin_b(k5, hidden_size, output_size),
        "beta": jnp.asarray(beta, jnp.float32),         # learn_beta=True -> parameter
    }


if __name__ == "__main__":
    B, T, I, H, O = 2, 16, 4, 32, 2   # output_size must be 2 (module hard-codes out = zeros(B, 2))

    key = jax.random.PRNGKey(0)
    kp, kx = jax.random.split(key)
    params = init_params(kp, I, H, O, beta=0.9)
    # Scale inputs up a bit so some neurons actually cross threshold.
    x = 2.0 * jax.random.normal(kx, (B, T, I), jnp.float32)

    prob, spk_rec, mem_rec = spiking_rnn_forward(x, params, start_integration=0, time_block=8)
    jax.block_until_ready((prob, spk_rec, mem_rec))

    assert prob.shape == (B, O)
    assert spk_rec.shape == (B, T, H)
    assert mem_rec.shape == (B, T, H)
    print("KERNEL_OK")
</pallas_src>

<mosaic_0001>
module attributes {stable_mosaic.version = 11 : i64} {
  func.func @_spiking_rnn_kernel(%arg0: i32, %arg1: memref<1x1xf32, #tpu.memory_space<smem>>, %arg2: memref<2x8x4xf32, #tpu.memory_space<vmem>>, %arg3: memref<4x32xf32, #tpu.memory_space<vmem>>, %arg4: memref<1x32xf32, #tpu.memory_space<vmem>>, %arg5: memref<32x32xf32, #tpu.memory_space<vmem>>, %arg6: memref<32x2xf32, #tpu.memory_space<vmem>>, %arg7: memref<1x2xf32, #tpu.memory_space<vmem>>, %arg8: memref<2x2xf32, #tpu.memory_space<vmem>>, %arg9: memref<2x8x32xf32, #tpu.memory_space<vmem>>, %arg10: memref<2x8x32xf32, #tpu.memory_space<vmem>>, %arg11: memref<2x32xf32, #tpu.memory_space<vmem>>, %arg12: memref<2x32xf32, #tpu.memory_space<vmem>>, %arg13: memref<2x32xf32, #tpu.memory_space<vmem>>) attributes {dimension_semantics = [#tpu.dimension_semantics<arbitrary>], iteration_bounds = array<i64: 2>, scalar_prefetch = 0 : i64, scratch_operands = 3 : i64, tpu.core_type = #tpu.core_type<tc>, window_params = [{transform_indices = @transform_0, window_bounds = array<i64: 1, 1>}, {transform_indices = @transform_1, window_bounds = array<i64: 2, 8, 4>}, {pipeline_mode = #tpu.pipeline_mode<synchronous>, transform_indices = @transform_2, window_bounds = array<i64: 4, 32>}, {pipeline_mode = #tpu.pipeline_mode<synchronous>, transform_indices = @transform_3, window_bounds = array<i64: 1, 32>}, {pipeline_mode = #tpu.pipeline_mode<synchronous>, transform_indices = @transform_4, window_bounds = array<i64: 32, 32>}, {pipeline_mode = #tpu.pipeline_mode<synchronous>, transform_indices = @transform_5, window_bounds = array<i64: 32, 2>}, {pipeline_mode = #tpu.pipeline_mode<synchronous>, transform_indices = @transform_6, window_bounds = array<i64: 1, 2>}, {pipeline_mode = #tpu.pipeline_mode<synchronous>, transform_indices = @transform_7, window_bounds = array<i64: 2, 2>}, {transform_indices = @transform_8, window_bounds = array<i64: 2, 8, 32>}, {transform_indices = @transform_9, window_bounds = array<i64: 2, 8, 32>}]} {
    %c0_i32 = arith.constant 0 : i32
    %0 = arith.cmpi eq, %arg0, %c0_i32 : i32
    %1 = arith.extui %0 : i1 to i32
    %c0_i32_0 = arith.constant 0 : i32
    %2 = arith.cmpi ne, %1, %c0_i32_0 : i32
    scf.if %2 {
      %cst_113 = arith.constant 0.000000e+00 : f32
      %254 = vector.broadcast %cst_113 : f32 to vector<2x32xf32>
      %c0_114 = arith.constant 0 : index
      %c0_115 = arith.constant 0 : index
      %255 = vector.load %arg11[%c0_114, %c0_115] : memref<2x32xf32, #tpu.memory_space<vmem>>, vector<2x32xf32>
      tpu.vector_store %arg11[%c0_114, %c0_115], %254 {strides = array<i32>} : memref<2x32xf32, #tpu.memory_space<vmem>>, vector<2x32xf32>,
      %cst_116 = arith.constant 0.000000e+00 : f32
      %256 = vector.broadcast %cst_116 : f32 to vector<2x32xf32>
      %c0_117 = arith.constant 0 : index
      %c0_118 = arith.constant 0 : index
      %257 = vector.load %arg12[%c0_117, %c0_118] : memref<2x32xf32, #tpu.memory_space<vmem>>, vector<2x32xf32>
      tpu.vector_store %arg12[%c0_117, %c0_118], %256 {strides = array<i32>} : memref<2x32xf32, #tpu.memory_space<vmem>>, vector<2x32xf32>,
      %cst_119 = arith.constant 0.000000e+00 : f32
      %258 = vector.broadcast %cst_119 : f32 to vector<2x32xf32>
      %c0_120 = arith.constant 0 : index
      %c0_121 = arith.constant 0 : index
      %259 = vector.load %arg13[%c0_120, %c0_121] : memref<2x32xf32, #tpu.memory_space<vmem>>, vector<2x32xf32>
      tpu.vector_store %arg13[%c0_120, %c0_121], %258 {strides = array<i32>} : memref<2x32xf32, #tpu.memory_space<vmem>>, vector<2x32xf32>,
      %cst_122 = arith.constant 0.000000e+00 : f32
      %260 = vector.broadcast %cst_122 : f32 to vector<2x2xf32>
      %c0_123 = arith.constant 0 : index
      %c0_124 = arith.constant 0 : index
      %261 = vector.load %arg8[%c0_123, %c0_124] : memref<2x2xf32, #tpu.memory_space<vmem>>, vector<2x2xf32>
      tpu.vector_store %arg8[%c0_123, %c0_124], %260 {strides = array<i32>} : memref<2x2xf32, #tpu.memory_space<vmem>>, vector<2x2xf32>,
    } else {
    }
    %c0 = arith.constant 0 : index
    %c0_1 = arith.constant 0 : index
    %3 = memref.load %arg1[%c0, %c0_1] : memref<1x1xf32, #tpu.memory_space<smem>>
    %c0_2 = arith.constant 0 : index
    %c0_3 = arith.constant 0 : index
    %4 = vector.load %arg5[%c0_2, %c0_3] : memref<32x32xf32, #tpu.memory_space<vmem>>, vector<32x32xf32>
    %c0_4 = arith.constant 0 : index
    %c0_5 = arith.constant 0 : index
    %c0_6 = arith.constant 0 : index
    %5 = vector.load %arg2[%c0_4, %c0_5, %c0_6] : memref<2x8x4xf32, #tpu.memory_space<vmem>>, vector<2x8x4xf32>
    %6 = vector.shape_cast %5 : vector<2x8x4xf32> to vector<16x4xf32>
    %c0_7 = arith.constant 0 : index
    %c0_8 = arith.constant 0 : index
    %7 = vector.load %arg3[%c0_7, %c0_8] : memref<4x32xf32, #tpu.memory_space<vmem>>, vector<4x32xf32>
    %cst = arith.constant dense<0.000000e+00> : vector<16x32xf32>
    %8 = tpu.matmul %6, %7, %cst {dimension_numbers = #tpu.dot_dimension_numbers<[1], [0], [0], [1], [0, 0, 1, 1], [], []>} : vector<16x4xf32>, vector<4x32xf32>, vector<16x32xf32> -> vector<16x32xf32>
    %c0_9 = arith.constant 0 : index
    %c0_10 = arith.constant 0 : index
    %9 = vector.load %arg4[%c0_9, %c0_10] : memref<1x32xf32, #tpu.memory_space<vmem>>, vector<1x32xf32>
    %10 = vector.broadcast %9 : vector<1x32xf32> to vector<16x32xf32>
    %11 = arith.addf %8, %10 : vector<16x32xf32>
    %12 = vector.shape_cast %11 : vector<16x32xf32> to vector<2x8x32xf32>
    %c0_11 = arith.constant 0 : index
    %c0_12 = arith.constant 0 : index
    %13 = vector.load %arg11[%c0_11, %c0_12] : memref<2x32xf32, #tpu.memory_space<vmem>>, vector<2x32xf32>
    %c0_13 = arith.constant 0 : index
    %c0_14 = arith.constant 0 : index
    %14 = vector.load %arg12[%c0_13, %c0_14] : memref<2x32xf32, #tpu.memory_space<vmem>>, vector<2x32xf32>
    %c0_15 = arith.constant 0 : index
    %c0_16 = arith.constant 0 : index
    %15 = vector.load %arg13[%c0_15, %c0_16] : memref<2x32xf32, #tpu.memory_space<vmem>>, vector<2x32xf32>
    %16 = vector.extract_strided_slice %12 {offsets = [0, 0, 0], sizes = [2, 1, 32], strides = [1, 1, 1]} : vector<2x8x32xf32> to vector<2x1x32xf32>
    %17 = vector.shape_cast %16 : vector<2x1x32xf32> to vector<2x32xf32>
    %cst_17 = arith.constant dense<0.000000e+00> : vector<2x32xf32>
    %18 = tpu.matmul %13, %4, %cst_17 {dimension_numbers = #tpu.dot_dimension_numbers<[1], [0], [0], [1], [0, 0, 1, 1], [], []>} : vector<2x32xf32>, vector<32x32xf32>, vector<2x32xf32> -> vector<2x32xf32>
    %19 = arith.addf %17, %18 : vector<2x32xf32>
    %cst_18 = arith.constant 1.000000e+00 : f32
    %20 = vector.broadcast %cst_18 : f32 to vector<2x32xf32>
    %21 = arith.subf %14, %20 : vector<2x32xf32>
    %cst_19 = arith.constant 0.000000e+00 : f32
    %22 = vector.broadcast %cst_19 : f32 to vector<2x32xf32>
    %23 = arith.cmpf ogt, %21, %22 : vector<2x32xf32>
    %24 = arith.extui %23 : vector<2x32xi1> to vector<2x32xi32>
    %25 = arith.sitofp %24 : vector<2x32xi32> to vector<2x32xf32>
    %26 = vector.broadcast %3 : f32 to vector<2x32xf32>
    %27 = arith.mulf %26, %14 : vector<2x32xf32>
    %28 = arith.addf %27, %19 : vector<2x32xf32>
    %cst_20 = arith.constant 1.000000e+00 : f32
    %29 = vector.broadcast %cst_20 : f32 to vector<2x32xf32>
    %30 = arith.mulf %25, %29 : vector<2x32xf32>
    %31 = arith.subf %28, %30 : vector<2x32xf32>
    %cst_21 = arith.constant 1.000000e+00 : f32
    %32 = vector.broadcast %cst_21 : f32 to vector<2x32xf32>
    %33 = arith.subf %31, %32 : vector<2x32xf32>
    %cst_22 = arith.constant 0.000000e+00 : f32
    %34 = vector.broadcast %cst_22 : f32 to vector<2x32xf32>
    %35 = arith.cmpf ogt, %33, %34 : vector<2x32xf32>
    %36 = arith.extui %35 : vector<2x32xi1> to vector<2x32xi32>
    %37 = arith.sitofp %36 : vector<2x32xi32> to vector<2x32xf32>
    %c0_23 = arith.constant 0 : index
    %c0_24 = arith.constant 0 : index
    %c0_25 = arith.constant 0 : index
    %38 = vector.load %arg9[%c0_23, %c0_24, %c0_25] : memref<2x8x32xf32, #tpu.memory_space<vmem>>, vector<2x1x32xf32>
    %39 = vector.shape_cast %38 : vector<2x1x32xf32> to vector<2x32xf32>
    %40 = vector.shape_cast %37 : vector<2x32xf32> to vector<2x1x32xf32>
    tpu.vector_store %arg9[%c0_23, %c0_24, %c0_25], %40 {strides = array<i32>} : memref<2x8x32xf32, #tpu.memory_space<vmem>>, vector<2x1x32xf32>,
    %c0_26 = arith.constant 0 : index
    %c0_27 = arith.constant 0 : index
    %c0_28 = arith.constant 0 : index
    %41 = vector.load %arg10[%c0_26, %c0_27, %c0_28] : memref<2x8x32xf32, #tpu.memory_space<vmem>>, vector<2x1x32xf32>
    %42 = vector.shape_cast %41 : vector<2x1x32xf32> to vector<2x32xf32>
    %43 = vector.shape_cast %31 : vector<2x32xf32> to vector<2x1x32xf32>
    tpu.vector_store %arg10[%c0_26, %c0_27, %c0_28], %43 {strides = array<i32>} : memref<2x8x32xf32, #tpu.memory_space<vmem>>, vector<2x1x32xf32>,
    %44 = arith.addf %15, %37 : vector<2x32xf32>
    %45 = vector.extract_strided_slice %12 {offsets = [0, 1, 0], sizes = [2, 1, 32], strides = [1, 1, 1]} : vector<2x8x32xf32> to vector<2x1x32xf32>
    %46 = vector.shape_cast %45 : vector<2x1x32xf32> to vector<2x32xf32>
    %cst_29 = arith.constant dense<0.000000e+00> : vector<2x32xf32>
    %47 = tpu.matmul %37, %4, %cst_29 {dimension_numbers = #tpu.dot_dimension_numbers<[1], [0], [0], [1], [0, 0, 1, 1], [], []>} : vector<2x32xf32>, vector<32x32xf32>, vector<2x32xf32> -> vector<2x32xf32>
    %48 = arith.addf %46, %47 : vector<2x32xf32>
    %cst_30 = arith.constant 1.000000e+00 : f32
    %49 = vector.broadcast %cst_30 : f32 to vector<2x32xf32>
    %50 = arith.subf %31, %49 : vector<2x32xf32>
    %cst_31 = arith.constant 0.000000e+00 : f32
    %51 = vector.broadcast %cst_31 : f32 to vector<2x32xf32>
    %52 = arith.cmpf ogt, %50, %51 : vector<2x32xf32>
    %53 = arith.extui %52 : vector<2x32xi1> to vector<2x32xi32>
    %54 = arith.sitofp %53 : vector<2x32xi32> to vector<2x32xf32>
    %55 = vector.broadcast %3 : f32 to vector<2x32xf32>
    %56 = arith.mulf %55, %31 : vector<2x32xf32>
    %57 = arith.addf %56, %48 : vector<2x32xf32>
    %cst_32 = arith.constant 1.000000e+00 : f32
    %58 = vector.broadcast %cst_32 : f32 to vector<2x32xf32>
    %59 = arith.mulf %54, %58 : vector<2x32xf32>
    %60 = arith.subf %57, %59 : vector<2x32xf32>
    %cst_33 = arith.constant 1.000000e+00 : f32
    %61 = vector.broadcast %cst_33 : f32 to vector<2x32xf32>
    %62 = arith.subf %60, %61 : vector<2x32xf32>
    %cst_34 = arith.constant 0.000000e+00 : f32
    %63 = vector.broadcast %cst_34 : f32 to vector<2x32xf32>
    %64 = arith.cmpf ogt, %62, %63 : vector<2x32xf32>
    %65 = arith.extui %64 : vector<2x32xi1> to vector<2x32xi32>
    %66 = arith.sitofp %65 : vector<2x32xi32> to vector<2x32xf32>
    %c0_35 = arith.constant 0 : index
    %c1 = arith.constant 1 : index
    %c0_36 = arith.constant 0 : index
    %67 = vector.load %arg9[%c0_35, %c1, %c0_36] : memref<2x8x32xf32, #tpu.memory_space<vmem>>, vector<2x1x32xf32>
    %68 = vector.shape_cast %67 : vector<2x1x32xf32> to vector<2x32xf32>
    %69 = vector.shape_cast %66 : vector<2x32xf32> to vector<2x1x32xf32>
    tpu.vector_store %arg9[%c0_35, %c1, %c0_36], %69 {strides = array<i32>} : memref<2x8x32xf32, #tpu.memory_space<vmem>>, vector<2x1x32xf32>,
    %c0_37 = arith.constant 0 : index
    %c1_38 = arith.constant 1 : index
    %c0_39 = arith.constant 0 : index
    %70 = vector.load %arg10[%c0_37, %c1_38, %c0_39] : memref<2x8x32xf32, #tpu.memory_space<vmem>>, vector<2x1x32xf32>
    %71 = vector.shape_cast %70 : vector<2x1x32xf32> to vector<2x32xf32>
    %72 = vector.shape_cast %60 : vector<2x32xf32> to vector<2x1x32xf32>
    tpu.vector_store %arg10[%c0_37, %c1_38, %c0_39], %72 {strides = array<i32>} : memref<2x8x32xf32, #tpu.memory_space<vmem>>, vector<2x1x32xf32>,
    %73 = arith.addf %44, %66 : vector<2x32xf32>
    %74 = vector.extract_strided_slice %12 {offsets = [0, 2, 0], sizes = [2, 1, 32], strides = [1, 1, 1]} : vector<2x8x32xf32> to vector<2x1x32xf32>
    %75 = vector.shape_cast %74 : vector<2x1x32xf32> to vector<2x32xf32>
    %cst_40 = arith.constant dense<0.000000e+00> : vector<2x32xf32>
    %76 = tpu.matmul %66, %4, %cst_40 {dimension_numbers = #tpu.dot_dimension_numbers<[1], [0], [0], [1], [0, 0, 1, 1], [], []>} : vector<2x32xf32>, vector<32x32xf32>, vector<2x32xf32> -> vector<2x32xf32>
    %77 = arith.addf %75, %76 : vector<2x32xf32>
    %cst_41 = arith.constant 1.000000e+00 : f32
    %78 = vector.broadcast %cst_41 : f32 to vector<2x32xf32>
    %79 = arith.subf %60, %78 : vector<2x32xf32>
    %cst_42 = arith.constant 0.000000e+00 : f32
    %80 = vector.broadcast %cst_42 : f32 to vector<2x32xf32>
    %81 = arith.cmpf ogt, %79, %80 : vector<2x32xf32>
    %82 = arith.extui %81 : vector<2x32xi1> to vector<2x32xi32>
    %83 = arith.sitofp %82 : vector<2x32xi32> to vector<2x32xf32>
    %84 = vector.broadcast %3 : f32 to vector<2x32xf32>
    %85 = arith.mulf %84, %60 : vector<2x32xf32>
    %86 = arith.addf %85, %77 : vector<2x32xf32>
    %cst_43 = arith.constant 1.000000e+00 : f32
    %87 = vector.broadcast %cst_43 : f32 to vector<2x32xf32>
    %88 = arith.mulf %83, %87 : vector<2x32xf32>
    %89 = arith.subf %86, %88 : vector<2x32xf32>
    %cst_44 = arith.constant 1.000000e+00 : f32
    %90 = vector.broadcast %cst_44 : f32 to vector<2x32xf32>
    %91 = arith.subf %89, %90 : vector<2x32xf32>
    %cst_45 = arith.constant 0.000000e+00 : f32
    %92 = vector.broadcast %cst_45 : f32 to vector<2x32xf32>
    %93 = arith.cmpf ogt, %91, %92 : vector<2x32xf32>
    %94 = arith.extui %93 : vector<2x32xi1> to vector<2x32xi32>
    %95 = arith.sitofp %94 : vector<2x32xi32> to vector<2x32xf32>
    %c0_46 = arith.constant 0 : index
    %c2 = arith.constant 2 : index
    %c0_47 = arith.constant 0 : index
    %96 = vector.load %arg9[%c0_46, %c2, %c0_47] : memref<2x8x32xf32, #tpu.memory_space<vmem>>, vector<2x1x32xf32>
    %97 = vector.shape_cast %96 : vector<2x1x32xf32> to vector<2x32xf32>
    %98 = vector.shape_cast %95 : vector<2x32xf32> to vector<2x1x32xf32>
    tpu.vector_store %arg9[%c0_46, %c2, %c0_47], %98 {strides = array<i32>} : memref<2x8x32xf32, #tpu.memory_space<vmem>>, vector<2x1x32xf32>,
    %c0_48 = arith.constant 0 : index
    %c2_49 = arith.constant 2 : index
    %c0_50 = arith.constant 0 : index
    %99 = vector.load %arg10[%c0_48, %c2_49, %c0_50] : memref<2x8x32xf32, #tpu.memory_space<vmem>>, vector<2x1x32xf32>
    %100 = vector.shape_cast %99 : vector<2x1x32xf32> to vector<2x32xf32>
    %101 = vector.shape_cast %89 : vector<2x32xf32> to vector<2x1x32xf32>
    tpu.vector_store %arg10[%c0_48, %c2_49, %c0_50], %101 {strides = array<i32>} : memref<2x8x32xf32, #tpu.memory_space<vmem>>, vector<2x1x32xf32>,
    %102 = arith.addf %73, %95 : vector<2x32xf32>
    %103 = vector.extract_strided_slice %12 {offsets = [0, 3, 0], sizes = [2, 1, 32], strides = [1, 1, 1]} : vector<2x8x32xf32> to vector<2x1x32xf32>
    %104 = vector.shape_cast %103 : vector<2x1x32xf32> to vector<2x32xf32>
    %cst_51 = arith.constant dense<0.000000e+00> : vector<2x32xf32>
    %105 = tpu.matmul %95, %4, %cst_51 {dimension_numbers = #tpu.dot_dimension_numbers<[1], [0], [0], [1], [0, 0, 1, 1], [], []>} : vector<2x32xf32>, vector<32x32xf32>, vector<2x32xf32> -> vector<2x32xf32>
    %106 = arith.addf %104, %105 : vector<2x32xf32>
    %cst_52 = arith.constant 1.000000e+00 : f32
    %107 = vector.broadcast %cst_52 : f32 to vector<2x32xf32>
    %108 = arith.subf %89, %107 : vector<2x32xf32>
    %cst_53 = arith.constant 0.000000e+00 : f32
    %109 = vector.broadcast %cst_53 : f32 to vector<2x32xf32>
    %110 = arith.cmpf ogt, %108, %109 : vector<2x32xf32>
    %111 = arith.extui %110 : vector<2x32xi1> to vector<2x32xi32>
    %112 = arith.sitofp %111 : vector<2x32xi32> to vector<2x32xf32>
    %113 = vector.broadcast %3 : f32 to vector<2x32xf32>
    %114 = arith.mulf %113, %89 : vector<2x32xf32>
    %115 = arith.addf %114, %106 : vector<2x32xf32>
    %cst_54 = arith.constant 1.000000e+00 : f32
    %116 = vector.broadcast %cst_54 : f32 to vector<2x32xf32>
    %117 = arith.mulf %112, %116 : vector<2x32xf32>
    %118 = arith.subf %115, %117 : vector<2x32xf32>
    %cst_55 = arith.constant 1.000000e+00 : f32
    %119 = vector.broadcast %cst_55 : f32 to vector<2x32xf32>
    %120 = arith.subf %118, %119 : vector<2x32xf32>
    %cst_56 = arith.constant 0.000000e+00 : f32
    %121 = vector.broadcast %cst_56 : f32 to vector<2x32xf32>
    %122 = arith.cmpf ogt, %120, %121 : vector<2x32xf32>
    %123 = arith.extui %122 : vector<2x32xi1> to vector<2x32xi32>
    %124 = arith.sitofp %123 : vector<2x32xi32> to vector<2x32xf32>
    %c0_57 = arith.constant 0 : index
    %c3 = arith.constant 3 : index
    %c0_58 = arith.constant 0 : index
    %125 = vector.load %arg9[%c0_57, %c3, %c0_58] : memref<2x8x32xf32, #tpu.memory_space<vmem>>, vector<2x1x32xf32>
    %126 = vector.shape_cast %125 : vector<2x1x32xf32> to vector<2x32xf32>
    %127 = vector.shape_cast %124 : vector<2x32xf32> to vector<2x1x32xf32>
    tpu.vector_store %arg9[%c0_57, %c3, %c0_58], %127 {strides = array<i32>} : memref<2x8x32xf32, #tpu.memory_space<vmem>>, vector<2x1x32xf32>,
    %c0_59 = arith.constant 0 : index
    %c3_60 = arith.constant 3 : index
    %c0_61 = arith.constant 0 : index
    %128 = vector.load %arg10[%c0_59, %c3_60, %c0_61] : memref<2x8x32xf32, #tpu.memory_space<vmem>>, vector<2x1x32xf32>
    %129 = vector.shape_cast %128 : vector<2x1x32xf32> to vector<2x32xf32>
    %130 = vector.shape_cast %118 : vector<2x32xf32> to vector<2x1x32xf32>
    tpu.vector_store %arg10[%c0_59, %c3_60, %c0_61], %130 {strides = array<i32>} : memref<2x8x32xf32, #tpu.memory_space<vmem>>, vector<2x1x32xf32>,
    %131 = arith.addf %102, %124 : vector<2x32xf32>
    %132 = vector.extract_strided_slice %12 {offsets = [0, 4, 0], sizes = [2, 1, 32], strides = [1, 1, 1]} : vector<2x8x32xf32> to vector<2x1x32xf32>
    %133 = vector.shape_cast %132 : vector<2x1x32xf32> to vector<2x32xf32>
    %cst_62 = arith.constant dense<0.000000e+00> : vector<2x32xf32>
    %134 = tpu.matmul %124, %4, %cst_62 {dimension_numbers = #tpu.dot_dimension_numbers<[1], [0], [0], [1], [0, 0, 1, 1], [], []>} : vector<2x32xf32>, vector<32x32xf32>, vector<2x32xf32> -> vector<2x32xf32>
    %135 = arith.addf %133, %134 : vector<2x32xf32>
    %cst_63 = arith.constant 1.000000e+00 : f32
    %136 = vector.broadcast %cst_63 : f32 to vector<2x32xf32>
    %137 = arith.subf %118, %136 : vector<2x32xf32>
    %cst_64 = arith.constant 0.000000e+00 : f32
    %138 = vector.broadcast %cst_64 : f32 to vector<2x32xf32>
    %139 = arith.cmpf ogt, %137, %138 : vector<2x32xf32>
    %140 = arith.extui %139 : vector<2x32xi1> to vector<2x32xi32>
    %141 = arith.sitofp %140 : vector<2x32xi32> to vector<2x32xf32>
    %142 = vector.broadcast %3 : f32 to vector<2x32xf32>
    %143 = arith.mulf %142, %118 : vector<2x32xf32>
    %144 = arith.addf %143, %135 : vector<2x32xf32>
    %cst_65 = arith.constant 1.000000e+00 : f32
    %145 = vector.broadcast %cst_65 : f32 to vector<2x32xf32>
    %146 = arith.mulf %141, %145 : vector<2x32xf32>
    %147 = arith.subf %144, %146 : vector<2x32xf32>
    %cst_66 = arith.constant 1.000000e+00 : f32
    %148 = vector.broadcast %cst_66 : f32 to vector<2x32xf32>
    %149 = arith.subf %147, %148 : vector<2x32xf32>
    %cst_67 = arith.constant 0.000000e+00 : f32
    %150 = vector.broadcast %cst_67 : f32 to vector<2x32xf32>
    %151 = arith.cmpf ogt, %149, %150 : vector<2x32xf32>
    %152 = arith.extui %151 : vector<2x32xi1> to vector<2x32xi32>
    %153 = arith.sitofp %152 : vector<2x32xi32> to vector<2x32xf32>
    %c0_68 = arith.constant 0 : index
    %c4 = arith.constant 4 : index
    %c0_69 = arith.constant 0 : index
    %154 = vector.load %arg9[%c0_68, %c4, %c0_69] : memref<2x8x32xf32, #tpu.memory_space<vmem>>, vector<2x1x32xf32>
    %155 = vector.shape_cast %154 : vector<2x1x32xf32> to vector<2x32xf32>
    %156 = vector.shape_cast %153 : vector<2x32xf32> to vector<2x1x32xf32>
    tpu.vector_store %arg9[%c0_68, %c4, %c0_69], %156 {strides = array<i32>} : memref<2x8x32xf32, #tpu.memory_space<vmem>>, vector<2x1x32xf32>,
    %c0_70 = arith.constant 0 : index
    %c4_71 = arith.constant 4 : index
    %c0_72 = arith.constant 0 : index
    %157 = vector.load %arg10[%c0_70, %c4_71, %c0_72] : memref<2x8x32xf32, #tpu.memory_space<vmem>>, vector<2x1x32xf32>
    %158 = vector.shape_cast %157 : vector<2x1x32xf32> to vector<2x32xf32>
    %159 = vector.shape_cast %147 : vector<2x32xf32> to vector<2x1x32xf32>
    tpu.vector_store %arg10[%c0_70, %c4_71, %c0_72], %159 {strides = array<i32>} : memref<2x8x32xf32, #tpu.memory_space<vmem>>, vector<2x1x32xf32>,
    %160 = arith.addf %131, %153 : vector<2x32xf32>
    %161 = vector.extract_strided_slice %12 {offsets = [0, 5, 0], sizes = [2, 1, 32], strides = [1, 1, 1]} : vector<2x8x32xf32> to vector<2x1x32xf32>
    %162 = vector.shape_cast %161 : vector<2x1x32xf32> to vector<2x32xf32>
    %cst_73 = arith.constant dense<0.000000e+00> : vector<2x32xf32>
    %163 = tpu.matmul %153, %4, %cst_73 {dimension_numbers = #tpu.dot_dimension_numbers<[1], [0], [0], [1], [0, 0, 1, 1], [], []>} : vector<2x32xf32>, vector<32x32xf32>, vector<2x32xf32> -> vector<2x32xf32>
    %164 = arith.addf %162, %163 : vector<2x32xf32>
    %cst_74 = arith.constant 1.000000e+00 : f32
    %165 = vector.broadcast %cst_74 : f32 to vector<2x32xf32>
    %166 = arith.subf %147, %165 : vector<2x32xf32>
    %cst_75 = arith.constant 0.000000e+00 : f32
    %167 = vector.broadcast %cst_75 : f32 to vector<2x32xf32>
    %168 = arith.cmpf ogt, %166, %167 : vector<2x32xf32>
    %169 = arith.extui %168 : vector<2x32xi1> to vector<2x32xi32>
    %170 = arith.sitofp %169 : vector<2x32xi32> to vector<2x32xf32>
    %171 = vector.broadcast %3 : f32 to vector<2x32xf32>
    %172 = arith.mulf %171, %147 : vector<2x32xf32>
    %173 = arith.addf %172, %164 : vector<2x32xf32>
    %cst_76 = arith.constant 1.000000e+00 : f32
    %174 = vector.broadcast %cst_76 : f32 to vector<2x32xf32>
    %175 = arith.mulf %170, %174 : vector<2x32xf32>
    %176 = arith.subf %173, %175 : vector<2x32xf32>
    %cst_77 = arith.constant 1.000000e+00 : f32
    %177 = vector.broadcast %cst_77 : f32 to vector<2x32xf32>
    %178 = arith.subf %176, %177 : vector<2x32xf32>
    %cst_78 = arith.constant 0.000000e+00 : f32
    %179 = vector.broadcast %cst_78 : f32 to vector<2x32xf32>
    %180 = arith.cmpf ogt, %178, %179 : vector<2x32xf32>
    %181 = arith.extui %180 : vector<2x32xi1> to vector<2x32xi32>
    %182 = arith.sitofp %181 : vector<2x32xi32> to vector<2x32xf32>
    %c0_79 = arith.constant 0 : index
    %c5 = arith.constant 5 : index
    %c0_80 = arith.constant 0 : index
    %183 = vector.load %arg9[%c0_79, %c5, %c0_80] : memref<2x8x32xf32, #tpu.memory_space<vmem>>, vector<2x1x32xf32>
    %184 = vector.shape_cast %183 : vector<2x1x32xf32> to vector<2x32xf32>
    %185 = vector.shape_cast %182 : vector<2x32xf32> to vector<2x1x32xf32>
    tpu.vector_store %arg9[%c0_79, %c5, %c0_80], %185 {strides = array<i32>} : memref<2x8x32xf32, #tpu.memory_space<vmem>>, vector<2x1x32xf32>,
    %c0_81 = arith.constant 0 : index
    %c5_82 = arith.constant 5 : index
    %c0_83 = arith.constant 0 : index
    %186 = vector.load %arg10[%c0_81, %c5_82, %c0_83] : memref<2x8x32xf32, #tpu.memory_space<vmem>>, vector<2x1x32xf32>
    %187 = vector.shape_cast %186 : vector<2x1x32xf32> to vector<2x32xf32>
    %188 = vector.shape_cast %176 : vector<2x32xf32> to vector<2x1x32xf32>
    tpu.vector_store %arg10[%c0_81, %c5_82, %c0_83], %188 {strides = array<i32>} : memref<2x8x32xf32, #tpu.memory_space<vmem>>, vector<2x1x32xf32>,
    %189 = arith.addf %160, %182 : vector<2x32xf32>
    %190 = vector.extract_strided_slice %12 {offsets = [0, 6, 0], sizes = [2, 1, 32], strides = [1, 1, 1]} : vector<2x8x32xf32> to vector<2x1x32xf32>
    %191 = vector.shape_cast %190 : vector<2x1x32xf32> to vector<2x32xf32>
    %cst_84 = arith.constant dense<0.000000e+00> : vector<2x32xf32>
    %192 = tpu.matmul %182, %4, %cst_84 {dimension_numbers = #tpu.dot_dimension_numbers<[1], [0], [0], [1], [0, 0, 1, 1], [], []>} : vector<2x32xf32>, vector<32x32xf32>, vector<2x32xf32> -> vector<2x32xf32>
    %193 = arith.addf %191, %192 : vector<2x32xf32>
    %cst_85 = arith.constant 1.000000e+00 : f32
    %194 = vector.broadcast %cst_85 : f32 to vector<2x32xf32>
    %195 = arith.subf %176, %194 : vector<2x32xf32>
    %cst_86 = arith.constant 0.000000e+00 : f32
    %196 = vector.broadcast %cst_86 : f32 to vector<2x32xf32>
    %197 = arith.cmpf ogt, %195, %196 : vector<2x32xf32>
    %198 = arith.extui %197 : vector<2x32xi1> to vector<2x32xi32>
    %199 = arith.sitofp %198 : vector<2x32xi32> to vector<2x32xf32>
    %200 = vector.broadcast %3 : f32 to vector<2x32xf32>
    %201 = arith.mulf %200, %176 : vector<2x32xf32>
    %202 = arith.addf %201, %193 : vector<2x32xf32>
    %cst_87 = arith.constant 1.000000e+00 : f32
    %203 = vector.broadcast %cst_87 : f32 to vector<2x32xf32>
    %204 = arith.mulf %199, %203 : vector<2x32xf32>
    %205 = arith.subf %202, %204 : vector<2x32xf32>
    %cst_88 = arith.constant 1.000000e+00 : f32
    %206 = vector.broadcast %cst_88 : f32 to vector<2x32xf32>
    %207 = arith.subf %205, %206 : vector<2x32xf32>
    %cst_89 = arith.constant 0.000000e+00 : f32
    %208 = vector.broadcast %cst_89 : f32 to vector<2x32xf32>
    %209 = arith.cmpf ogt, %207, %208 : vector<2x32xf32>
    %210 = arith.extui %209 : vector<2x32xi1> to vector<2x32xi32>
    %211 = arith.sitofp %210 : vector<2x32xi32> to vector<2x32xf32>
    %c0_90 = arith.constant 0 : index
    %c6 = arith.constant 6 : index
    %c0_91 = arith.constant 0 : index
    %212 = vector.load %arg9[%c0_90, %c6, %c0_91] : memref<2x8x32xf32, #tpu.memory_space<vmem>>, vector<2x1x32xf32>
    %213 = vector.shape_cast %212 : vector<2x1x32xf32> to vector<2x32xf32>
    %214 = vector.shape_cast %211 : vector<2x32xf32> to vector<2x1x32xf32>
    tpu.vector_store %arg9[%c0_90, %c6, %c0_91], %214 {strides = array<i32>} : memref<2x8x32xf32, #tpu.memory_space<vmem>>, vector<2x1x32xf32>,
    %c0_92 = arith.constant 0 : index
    %c6_93 = arith.constant 6 : index
    %c0_94 = arith.constant 0 : index
    %215 = vector.load %arg10[%c0_92, %c6_93, %c0_94] : memref<2x8x32xf32, #tpu.memory_space<vmem>>, vector<2x1x32xf32>
    %216 = vector.shape_cast %215 : vector<2x1x32xf32> to vector<2x32xf32>
    %217 = vector.shape_cast %205 : vector<2x32xf32> to vector<2x1x32xf32>
    tpu.vector_store %arg10[%c0_92, %c6_93, %c0_94], %217 {strides = array<i32>} : memref<2x8x32xf32, #tpu.memory_space<vmem>>, vector<2x1x32xf32>,
    %218 = arith.addf %189, %211 : vector<2x32xf32>
    %219 = vector.extract_strided_slice %12 {offsets = [0, 7, 0], sizes = [2, 1, 32], strides = [1, 1, 1]} : vector<2x8x32xf32> to vector<2x1x32xf32>
    %220 = vector.shape_cast %219 : vector<2x1x32xf32> to vector<2x32xf32>
    %cst_95 = arith.constant dense<0.000000e+00> : vector<2x32xf32>
    %221 = tpu.matmul %211, %4, %cst_95 {dimension_numbers = #tpu.dot_dimension_numbers<[1], [0], [0], [1], [0, 0, 1, 1], [], []>} : vector<2x32xf32>, vector<32x32xf32>, vector<2x32xf32> -> vector<2x32xf32>
    %222 = arith.addf %220, %221 : vector<2x32xf32>
    %cst_96 = arith.constant 1.000000e+00 : f32
    %223 = vector.broadcast %cst_96 : f32 to vector<2x32xf32>
    %224 = arith.subf %205, %223 : vector<2x32xf32>
    %cst_97 = arith.constant 0.000000e+00 : f32
    %225 = vector.broadcast %cst_97 : f32 to vector<2x32xf32>
    %226 = arith.cmpf ogt, %224, %225 : vector<2x32xf32>
    %227 = arith.extui %226 : vector<2x32xi1> to vector<2x32xi32>
    %228 = arith.sitofp %227 : vector<2x32xi32> to vector<2x32xf32>
    %229 = vector.broadcast %3 : f32 to vector<2x32xf32>
    %230 = arith.mulf %229, %205 : vector<2x32xf32>
    %231 = arith.addf %230, %222 : vector<2x32xf32>
    %cst_98 = arith.constant 1.000000e+00 : f32
    %232 = vector.broadcast %cst_98 : f32 to vector<2x32xf32>
    %233 = arith.mulf %228, %232 : vector<2x32xf32>
    %234 = arith.subf %231, %233 : vector<2x32xf32>
    %cst_99 = arith.constant 1.000000e+00 : f32
    %235 = vector.broadcast %cst_99 : f32 to vector<2x32xf32>
    %236 = arith.subf %234, %235 : vector<2x32xf32>
    %cst_100 = arith.constant 0.000000e+00 : f32
    %237 = vector.broadcast %cst_100 : f32 to vector<2x32xf32>
    %238 = arith.cmpf ogt, %236, %237 : vector<2x32xf32>
    %239 = arith.extui %238 : vector<2x32xi1> to vector<2x32xi32>
    %240 = arith.sitofp %239 : vector<2x32xi32> to vector<2x32xf32>
    %c0_101 = arith.constant 0 : index
    %c7 = arith.constant 7 : index
    %c0_102 = arith.constant 0 : index
    %241 = vector.load %arg9[%c0_101, %c7, %c0_102] : memref<2x8x32xf32, #tpu.memory_space<vmem>>, vector<2x1x32xf32>
    %242 = vector.shape_cast %241 : vector<2x1x32xf32> to vector<2x32xf32>
    %243 = vector.shape_cast %240 : vector<2x32xf32> to vector<2x1x32xf32>
    tpu.vector_store %arg9[%c0_101, %c7, %c0_102], %243 {strides = array<i32>} : memref<2x8x32xf32, #tpu.memory_space<vmem>>, vector<2x1x32xf32>,
    %c0_103 = arith.constant 0 : index
    %c7_104 = arith.constant 7 : index
    %c0_105 = arith.constant 0 : index
    %244 = vector.load %arg10[%c0_103, %c7_104, %c0_105] : memref<2x8x32xf32, #tpu.memory_space<vmem>>, vector<2x1x32xf32>
    %245 = vector.shape_cast %244 : vector<2x1x32xf32> to vector<2x32xf32>
    %246 = vector.shape_cast %234 : vector<2x32xf32> to vector<2x1x32xf32>
    tpu.vector_store %arg10[%c0_103, %c7_104, %c0_105], %246 {strides = array<i32>} : memref<2x8x32xf32, #tpu.memory_space<vmem>>, vector<2x1x32xf32>,
    %247 = arith.addf %218, %240 : vector<2x32xf32>
    %c0_106 = arith.constant 0 : index
    %c0_107 = arith.constant 0 : index
    %248 = vector.load %arg11[%c0_106, %c0_107] : memref<2x32xf32, #tpu.memory_space<vmem>>, vector<2x32xf32>
    tpu.vector_store %arg11[%c0_106, %c0_107], %240 {strides = array<i32>} : memref<2x32xf32, #tpu.memory_space<vmem>>, vector<2x32xf32>,
    %c0_108 = arith.constant 0 : index
    %c0_109 = arith.constant 0 : index
    %249 = vector.load %arg12[%c0_108, %c0_109] : memref<2x32xf32, #tpu.memory_space<vmem>>, vector<2x32xf32>
    tpu.vector_store %arg12[%c0_108, %c0_109], %234 {strides = array<i32>} : memref<2x32xf32, #tpu.memory_space<vmem>>, vector<2x32xf32>,
    %c0_110 = arith.constant 0 : index
    %c0_111 = arith.constant 0 : index
    %250 = vector.load %arg13[%c0_110, %c0_111] : memref<2x32xf32, #tpu.memory_space<vmem>>, vector<2x32xf32>
    tpu.vector_store %arg13[%c0_110, %c0_111], %247 {strides = array<i32>} : memref<2x32xf32, #tpu.memory_space<vmem>>, vector<2x32xf32>,
    %c1_i32 = arith.constant 1 : i32
    %251 = arith.cmpi eq, %arg0, %c1_i32 : i32
    %252 = arith.extui %251 : i1 to i32
    %c0_i32_112 = arith.constant 0 : i32
    %253 = arith.cmpi ne, %252, %c0_i32_112 : i32
    scf.if %253 {
      %c0_113 = arith.constant 0 : index
      %c0_114 = arith.constant 0 : index
      %254 = vector.load %arg6[%c0_113, %c0_114] : memref<32x2xf32, #tpu.memory_space<vmem>>, vector<32x2xf32>
      %cst_115 = arith.constant dense<0.000000e+00> : vector<2x2xf32>
      %255 = tpu.matmul %247, %254, %cst_115 {dimension_numbers = #tpu.dot_dimension_numbers<[1], [0], [0], [1], [0, 0, 1, 1], [], []>} : vector<2x32xf32>, vector<32x2xf32>, vector<2x2xf32> -> vector<2x2xf32>
      %c0_116 = arith.constant 0 : index
      %c0_117 = arith.constant 0 : index
      %256 = vector.load %arg7[%c0_116, %c0_117] : memref<1x2xf32, #tpu.memory_space<vmem>>, vector<1x2xf32>
      %cst_118 = arith.constant 1.600000e+01 : f32
      %257 = vector.broadcast %cst_118 : f32 to vector<1x2xf32>
      %258 = arith.mulf %257, %256 : vector<1x2xf32>
      %259 = vector.broadcast %258 : vector<1x2xf32> to vector<2x2xf32>
      %260 = arith.addf %255, %259 : vector<2x2xf32>
      %cst_119 = arith.constant dense<0xFF800000> : vector<2xf32>
      %261 = vector.multi_reduction <maximumf>, %260, %cst_119 [1] : vector<2x2xf32> to vector<2xf32>
      %262 = vector.shape_cast %261 : vector<2xf32> to vector<2x1xf32>
      %263 = vector.broadcast %262 : vector<2x1xf32> to vector<2x2xf32>
      %264 = arith.subf %260, %263 : vector<2x2xf32>
      %265 = math.exp %264 : vector<2x2xf32>
      %cst_120 = arith.constant dense<0.000000e+00> : vector<2xf32>
      %266 = vector.multi_reduction <add>, %265, %cst_120 [1] : vector<2x2xf32> to vector<2xf32>
      %267 = vector.shape_cast %266 : vector<2xf32> to vector<2x1xf32>
      %268 = vector.broadcast %267 : vector<2x1xf32> to vector<2x2xf32>
      %269 = arith.divf %265, %268 : vector<2x2xf32>
      %c0_121 = arith.constant 0 : index
      %c0_122 = arith.constant 0 : index
      %270 = vector.load %arg8[%c0_121, %c0_122] : memref<2x2xf32, #tpu.memory_space<vmem>>, vector<2x2xf32>
      tpu.vector_store %arg8[%c0_121, %c0_122], %269 {strides = array<i32>} : memref<2x2xf32, #tpu.memory_space<vmem>>, vector<2x2xf32>,
    } else {
    }
    return
  }
  func.func @transform_0(%arg0: i32) -> (i32, i32) {
    %c0_i32 = arith.constant 0 : i32
    %c0_i32_0 = arith.constant 0 : i32
    %c0_i32_1 = arith.constant 0 : i32
    return %c0_i32, %c0_i32_0 : i32, i32
  }
  func.func @transform_1(%arg0: i32) -> (i32, i32, i32) {
    %c0_i32 = arith.constant 0 : i32
    %c0_i32_0 = arith.constant 0 : i32
    %c0_i32_1 = arith.constant 0 : i32
    return %c0_i32, %arg0, %c0_i32_0 : i32, i32, i32
  }
  func.func @transform_2(%arg0: i32) -> (i32, i32) {
    %c0_i32 = arith.constant 0 : i32
    %c0_i32_0 = arith.constant 0 : i32
    %c0_i32_1 = arith.constant 0 : i32
    return %c0_i32, %c0_i32_0 : i32, i32
  }
  func.func @transform_3(%arg0: i32) -> (i32, i32) {
    %c0_i32 = arith.constant 0 : i32
    %c0_i32_0 = arith.constant 0 : i32
    %c0_i32_1 = arith.constant 0 : i32
    return %c0_i32, %c0_i32_0 : i32, i32
  }
  func.func @transform_4(%arg0: i32) -> (i32, i32) {
    %c0_i32 = arith.constant 0 : i32
    %c0_i32_0 = arith.constant 0 : i32
    %c0_i32_1 = arith.constant 0 : i32
    return %c0_i32, %c0_i32_0 : i32, i32
  }
  func.func @transform_5(%arg0: i32) -> (i32, i32) {
    %c0_i32 = arith.constant 0 : i32
    %c0_i32_0 = arith.constant 0 : i32
    %c0_i32_1 = arith.constant 0 : i32
    return %c0_i32, %c0_i32_0 : i32, i32
  }
  func.func @transform_6(%arg0: i32) -> (i32, i32) {
    %c0_i32 = arith.constant 0 : i32
    %c0_i32_0 = arith.constant 0 : i32
    %c0_i32_1 = arith.constant 0 : i32
    return %c0_i32, %c0_i32_0 : i32, i32
  }
  func.func @transform_7(%arg0: i32) -> (i32, i32) {
    %c0_i32 = arith.constant 0 : i32
    %c0_i32_0 = arith.constant 0 : i32
    %c0_i32_1 = arith.constant 0 : i32
    return %c0_i32, %c0_i32_0 : i32, i32
  }
  func.func @transform_8(%arg0: i32) -> (i32, i32, i32) {
    %c0_i32 = arith.constant 0 : i32
    %c0_i32_0 = arith.constant 0 : i32
    %c0_i32_1 = arith.constant 0 : i32
    return %c0_i32, %arg0, %c0_i32_0 : i32, i32, i32
  }
  func.func @transform_9(%arg0: i32) -> (i32, i32, i32) {
    %c0_i32 = arith.constant 0 : i32
    %c0_i32_0 = arith.constant 0 : i32
    %c0_i32_1 = arith.constant 0 : i32
    return %c0_i32, %arg0, %c0_i32_0 : i32, i32, i32
  }
}

</mosaic_0001>

<llo_original>
// kernel: tpu_custom_call.1
$region0: #{tpu_custom_call.1}
  #allocation0 [shape = 'u32[]', space=smem, size = 0x4, offset = 0x4, fixed_abs, tag = 'smem constant byte address 0x4 - core index']
  #allocation1 [shape = 'u32[72,128]{1,0:T(1,128)}', space=vmem, size = 0x9000, scoped, tag = 'internal scratch']
  #allocation2 [shape = 'f32[2,32]{1,0:T(2,128)}', space=vmem, size = 0x400, scoped, tag = 'scratch operand']
  #allocation3 [shape = 'f32[2,32]{1,0:T(2,128)}', space=vmem, size = 0x400, scoped, tag = 'scratch operand']
  #allocation4 [shape = 'f32[2,32]{1,0:T(2,128)}', space=vmem, size = 0x400, scoped, tag = 'scratch operand']
  #allocation5 [shape = 'f32[1,1]{1,0:T(1,128)S(6)}', space=smem, size = 0x200, scoped, tag = 'scoped memory for tpu_custom_call.1']
  %s0 = inlined_call_operand.<no memory space> [shape: f32[1,1], index: 0, kind: input, shape index: {}]
  %s1 = inlined_call_operand.vmem [shape: f32[2,16,4], index: 1, kind: input, shape index: {}]
  %s2 = inlined_call_operand.vmem [shape: f32[4,32], index: 2, kind: input, shape index: {}]
  %s3 = inlined_call_operand.vmem [shape: f32[1,32], index: 3, kind: input, shape index: {}]
  %s4 = inlined_call_operand.vmem [shape: f32[32,32], index: 4, kind: input, shape index: {}]
  %s5 = inlined_call_operand.vmem [shape: f32[32,2], index: 5, kind: input, shape index: {}]
  %s6 = inlined_call_operand.vmem [shape: f32[1,2], index: 6, kind: input, shape index: {}]
  %s7 = inlined_call_operand.hbm [shape: f32[2,2], index: 7, kind: output, shape index: {0}]
  %s8 = inlined_call_operand.hbm [shape: f32[2,16,32], index: 8, kind: output, shape index: {1}]
  %s9 = inlined_call_operand.hbm [shape: f32[2,16,32], index: 9, kind: output, shape index: {2}]
  %10 = xla_tuple %s7, %s8, %s9
  %s11 = sld [smem:[#allocation0]]
  $region123: #{tpu_custom_call.1} parent=0
    _
  %s13 = ssub.s32 1, %s11
  %s14 = scalar_select 0, %s13, %s11
  %15 = sst [smem:[#allocation5]] %s0
  $region1: #{tpu_custom_call.1} parent=0
    #allocation6 [shape = 'u8[16384]{0}', space=vmem, size = 0x4000, scoped, tag = 'input window, operand 1']
    #allocation7 [shape = 'u8[1024]{0}', space=vmem, size = 0x400, scoped, tag = 'output window, operand 0, single buffered']
    #allocation8 [shape = 's32[2]{0}', space=sflag, size = 0x8, scoped, tag = 'scoped memory for tpu_custom_call.1']
    #allocation9 [shape = 'u8[16384]{0}', space=vmem, size = 0x4000, scoped, tag = 'output window, operand 1']
    #allocation10 [shape = 's32[2]{0}', space=sflag, size = 0x8, scoped, tag = 'scoped memory for tpu_custom_call.1']
    #allocation11 [shape = 'u8[16384]{0}', space=vmem, size = 0x4000, scoped, tag = 'output window, operand 2']
    %16 = vsyncpa [#allocation8], 0
    %17 = vsyncpa [#allocation10], 0
    %s18 = scalar_lea.sflag [#allocation10], 1
    %19 = vsyncpa %s18, 0
    loop: start=0, step=1, limit=4
    $region2: #{tpu_custom_call.1} parent=1 // loop_pre_header
      _
    $region3: #{tpu_custom_call.1} parent=1 // loop_header
      %s21 = sphi 0, %s25
      %p22 = scmp.ge.s32.totalorder %s21, 4
      %s29 = sphi 0, %s29
      %s31 = sphi 0, %s29
      %s32 = sphi 0, %s31
      %s46 = sphi 0, %s32
      %s52 = sphi 0, %s54
      %s55 = sphi 0, %s52
      %s56 = sphi 0, %s55
      %s72 = sphi 0, %s56
      %s76 = sphi 0, %s76
      %s78 = sphi 0, %s76
      %s79 = sphi 0, %s78
      %s93 = sphi 0, %s79
      %s97 = sphi 0, %s97
      %s99 = sphi 0, %s97
      %s100 = sphi 0, %s99
      %s114 = sphi 0, %s100
      %s118 = sphi 0, %s118
      %s120 = sphi 0, %s118
      %s121 = sphi 0, %s120
      %s135 = sphi 0, %s121
      %s139 = sphi 0, %s139
      %s141 = sphi 0, %s139
      %s142 = sphi 0, %s141
      %s156 = sphi 0, %s142
      %s160 = sphi 0, %s160
      %s162 = sphi 0, %s160
      %s163 = sphi 0, %s162
      %s177 = sphi 0, %s163
      %s181 = sphi 0, %s181
      %s183 = sphi 0, %s181
      %s184 = sphi 0, %s183
      %s198 = sphi 0, %s184
      %s204 = sphi 0, %s206
      %s207 = sphi 0, %s204
      %s208 = sphi 0, %s207
      %s224 = sphi 0, %s208
      %s230 = sphi 0, %s232
      %s233 = sphi 0, %s230
      %s234 = sphi 0, %s233
      %s250 = sphi 0, %s234
    $region4: #{tpu_custom_call.1} parent=1 // loop_header_branch
      %24 = sbr.rel (%p22) target = $region8
    $region5: #{tpu_custom_call.1} parent=1 // loop_body
      %s26 = ssub.s32 %s21, 1
      %s27 = ssub.s32 %s21, 2
      %s28 = sadd.s32 %s21, 1
      %s30 = sadd.s32 %s29, 1
      %p33 = scmp.eq.s32.totalorder %s21, 1
      %p34 = scmp.ne.s32.totalorder %s29, %s31
      %p35 = scmp.eq.s32.totalorder %s21, 0
      %p36 = por %p34, %p35
      %p37 = scmp.ne.s32.totalorder %s29, %s31
      %p38 = scmp.eq.s32.totalorder %s26, 1
      %p39 = por %p37, %p38
      %p40 = scmp.ne.s32.totalorder %s31, %s32
      %p41 = scmp.eq.s32.totalorder %s26, 0
      %p42 = por %p40, %p41
      %p43 = scmp.ne.s32.totalorder %s31, %s32
      %p44 = scmp.eq.s32.totalorder %s27, 1
      %p45 = por %p43, %p44
      %p47 = scmp.ne.s32.totalorder %s32, %s46
      %p48 = scmp.eq.s32.totalorder %s27, 0
      %p49 = por %p47, %p48
      %s50 = ssub.s32 %s21, %s28
      %p51 = scmp.eq.s32.totalorder %s50, 0
      %s53 = sadd.s32 %s52, 1
      %s54 = scalar_select %p51, %s52, %s53
      %p57 = pneg %p51
      %p58 = scmp.eq.s32.totalorder %s21, 1
      %p59 = por %p57, %p58
      %p60 = scmp.ne.s32.totalorder %s52, %s55
      %p61 = scmp.eq.s32.totalorder %s21, 0
      %p62 = por %p60, %p61
      %p63 = scmp.ne.s32.totalorder %s52, %s55
      %p64 = scmp.eq.s32.totalorder %s26, 1
      %p65 = por %p63, %p64
      %p66 = scmp.ne.s32.totalorder %s55, %s56
      %p67 = scmp.eq.s32.totalorder %s26, 0
      %p68 = por %p66, %p67
      %p69 = scmp.ne.s32.totalorder %s55, %s56
      %p70 = scmp.eq.s32.totalorder %s27, 1
      %p71 = por %p69, %p70
      %p73 = scmp.ne.s32.totalorder %s56, %s72
      %p74 = scmp.eq.s32.totalorder %s27, 0
      %p75 = por %p73, %p74
      %s77 = sadd.s32 %s76, 1
      %p80 = scmp.eq.s32.totalorder %s21, 1
      %p81 = scmp.ne.s32.totalorder %s76, %s78
      %p82 = scmp.eq.s32.totalorder %s21, 0
      %p83 = por %p81, %p82
      %p84 = scmp.ne.s32.totalorder %s76, %s78
      %p85 = scmp.eq.s32.totalorder %s26, 1
      %p86 = por %p84, %p85
      %p87 = scmp.ne.s32.totalorder %s78, %s79
      %p88 = scmp.eq.s32.totalorder %s26, 0
      %p89 = por %p87, %p88
      %p90 = scmp.ne.s32.totalorder %s78, %s79
      %p91 = scmp.eq.s32.totalorder %s27, 1
      %p92 = por %p90, %p91
      %p94 = scmp.ne.s32.totalorder %s79, %s93
      %p95 = scmp.eq.s32.totalorder %s27, 0
      %p96 = por %p94, %p95
      %s98 = sadd.s32 %s97, 1
      %p101 = scmp.eq.s32.totalorder %s21, 1
      %p102 = scmp.ne.s32.totalorder %s97, %s99
      %p103 = scmp.eq.s32.totalorder %s21, 0
      %p104 = por %p102, %p103
      %p105 = scmp.ne.s32.totalorder %s97, %s99
      %p106 = scmp.eq.s32.totalorder %s26, 1
      %p107 = por %p105, %p106
      %p108 = scmp.ne.s32.totalorder %s99, %s100
      %p109 = scmp.eq.s32.totalorder %s26, 0
      %p110 = por %p108, %p109
      %p111 = scmp.ne.s32.totalorder %s99, %s100
      %p112 = scmp.eq.s32.totalorder %s27, 1
      %p113 = por %p111, %p112
      %p115 = scmp.ne.s32.totalorder %s100, %s114
      %p116 = scmp.eq.s32.totalorder %s27, 0
      %p117 = por %p115, %p116
      %s119 = sadd.s32 %s118, 1
      %p122 = scmp.eq.s32.totalorder %s21, 1
      %p123 = scmp.ne.s32.totalorder %s118, %s120
      %p124 = scmp.eq.s32.totalorder %s21, 0
      %p125 = por %p123, %p124
      %p126 = scmp.ne.s32.totalorder %s118, %s120
      %p127 = scmp.eq.s32.totalorder %s26, 1
      %p128 = por %p126, %p127
      %p129 = scmp.ne.s32.totalorder %s120, %s121
      %p130 = scmp.eq.s32.totalorder %s26, 0
      %p131 = por %p129, %p130
      %p132 = scmp.ne.s32.totalorder %s120, %s121
      %p133 = scmp.eq.s32.totalorder %s27, 1
      %p134 = por %p132, %p133
      %p136 = scmp.ne.s32.totalorder %s121, %s135
      %p137 = scmp.eq.s32.totalorder %s27, 0
      %p138 = por %p136, %p137
      %s140 = sadd.s32 %s139, 1
      %p143 = scmp.eq.s32.totalorder %s21, 1
      %p144 = scmp.ne.s32.totalorder %s139, %s141
      %p145 = scmp.eq.s32.totalorder %s21, 0
      %p146 = por %p144, %p145
      %p147 = scmp.ne.s32.totalorder %s139, %s141
      %p148 = scmp.eq.s32.totalorder %s26, 1
      %p149 = por %p147, %p148
      %p150 = scmp.ne.s32.totalorder %s141, %s142
      %p151 = scmp.eq.s32.totalorder %s26, 0
      %p152 = por %p150, %p151
      %p153 = scmp.ne.s32.totalorder %s141, %s142
      %p154 = scmp.eq.s32.totalorder %s27, 1
      %p155 = por %p153, %p154
      %p157 = scmp.ne.s32.totalorder %s142, %s156
      %p158 = scmp.eq.s32.totalorder %s27, 0
      %p159 = por %p157, %p158
      %s161 = sadd.s32 %s160, 1
      %p164 = scmp.eq.s32.totalorder %s21, 1
      %p165 = scmp.ne.s32.totalorder %s160, %s162
      %p166 = scmp.eq.s32.totalorder %s21, 0
      %p167 = por %p165, %p166
      %p168 = scmp.ne.s32.totalorder %s160, %s162
      %p169 = scmp.eq.s32.totalorder %s26, 1
      %p170 = por %p168, %p169
      %p171 = scmp.ne.s32.totalorder %s162, %s163
      %p172 = scmp.eq.s32.totalorder %s26, 0
      %p173 = por %p171, %p172
      %p174 = scmp.ne.s32.totalorder %s162, %s163
      %p175 = scmp.eq.s32.totalorder %s27, 1
      %p176 = por %p174, %p175
      %p178 = scmp.ne.s32.totalorder %s163, %s177
      %p179 = scmp.eq.s32.totalorder %s27, 0
      %p180 = por %p178, %p179
      %s182 = sadd.s32 %s181, 1
      %p185 = scmp.eq.s32.totalorder %s21, 1
      %p186 = scmp.ne.s32.totalorder %s181, %s183
      %p187 = scmp.eq.s32.totalorder %s21, 0
      %p188 = por %p186, %p187
      %p189 = scmp.ne.s32.totalorder %s181, %s183
      %p190 = scmp.eq.s32.totalorder %s26, 1
      %p191 = por %p189, %p190
      %p192 = scmp.ne.s32.totalorder %s183, %s184
      %p193 = scmp.eq.s32.totalorder %s26, 0
      %p194 = por %p192, %p193
      %p195 = scmp.ne.s32.totalorder %s183, %s184
      %p196 = scmp.eq.s32.totalorder %s27, 1
      %p197 = por %p195, %p196
      %p199 = scmp.ne.s32.totalorder %s184, %s198
      %p200 = scmp.eq.s32.totalorder %s27, 0
      %p201 = por %p199, %p200
      %s202 = ssub.s32 %s21, %s28
      %p203 = scmp.eq.s32.totalorder %s202, 0
      %s205 = sadd.s32 %s204, 1
      %s206 = scalar_select %p203, %s204, %s205
      %p209 = pneg %p203
      %p210 = scmp.eq.s32.totalorder %s21, 1
      %p211 = por %p209, %p210
      %p212 = scmp.ne.s32.totalorder %s204, %s207
      %p213 = scmp.eq.s32.totalorder %s21, 0
      %p214 = por %p212, %p213
      %p215 = scmp.ne.s32.totalorder %s204, %s207
      %p216 = scmp.eq.s32.totalorder %s26, 1
      %p217 = por %p215, %p216
      %p218 = scmp.ne.s32.totalorder %s207, %s208
      %p219 = scmp.eq.s32.totalorder %s26, 0
      %p220 = por %p218, %p219
      %p221 = scmp.ne.s32.totalorder %s207, %s208
      %p222 = scmp.eq.s32.totalorder %s27, 1
      %p223 = por %p221, %p222
      %p225 = scmp.ne.s32.totalorder %s208, %s224
      %p226 = scmp.eq.s32.totalorder %s27, 0
      %p227 = por %p225, %p226
      %s228 = ssub.s32 %s21, %s28
      %p229 = scmp.eq.s32.totalorder %s228, 0
      %s231 = sadd.s32 %s230, 1
      %s232 = scalar_select %p229, %s230, %s231
      %p235 = pneg %p229
      %p236 = scmp.eq.s32.totalorder %s21, 1
      %p237 = por %p235, %p236
      %p238 = scmp.ne.s32.totalorder %s230, %s233
      %p239 = scmp.eq.s32.totalorder %s21, 0
      %p240 = por %p238, %p239
      %p241 = scmp.ne.s32.totalorder %s230, %s233
      %p242 = scmp.eq.s32.totalorder %s26, 1
      %p243 = por %p241, %p242
      %p244 = scmp.ne.s32.totalorder %s233, %s234
      %p245 = scmp.eq.s32.totalorder %s26, 0
      %p246 = por %p244, %p245
      %p247 = scmp.ne.s32.totalorder %s233, %s234
      %p248 = scmp.eq.s32.totalorder %s27, 1
      %p249 = por %p247, %p248
      %p251 = scmp.ne.s32.totalorder %s234, %s250
      %p252 = scmp.eq.s32.totalorder %s27, 0
      %p253 = por %p251, %p252
      %p254 = scmp.le.s32.totalorder 1, %s21
      %p255 = scmp.lt.s32.totalorder %s21, 3
      %p256 = pnand %p254, %p255
      %p257 = pneg %p256
      // Predicated region
      $region9: #{tpu_custom_call.1} parent=5 // pred_check
        _
      $region10: #{tpu_custom_call.1} parent=5 // pred_check_branch
        %259 = sbr.rel (%p256) target = $region12
      $region11: #{tpu_custom_call.1} parent=5 // pred_region
        %s260 = ssub.s32 %s21, 1
        // Predicated region
        $region13: #{tpu_custom_call.1} parent=11 // pred_check
          %p261 = pneg %p42
        $region14: #{tpu_custom_call.1} parent=11 // pred_check_branch
          %263 = sbr.rel (%p261) target = $region16
        $region15: #{tpu_custom_call.1} parent=11 // pred_region
          _
        $region16: #{tpu_custom_call.1} parent=11 // pred_fallthru
          _
        // Predicated region
        $region17: #{tpu_custom_call.1} parent=11 // pred_check
          %p264 = pneg %p89
        $region18: #{tpu_custom_call.1} parent=11 // pred_check_branch
          %266 = sbr.rel (%p264) target = $region20
        $region19: #{tpu_custom_call.1} parent=11 // pred_region
          _
        $region20: #{tpu_custom_call.1} parent=11 // pred_fallthru
          _
        // Predicated region
        $region21: #{tpu_custom_call.1} parent=11 // pred_check
          %p267 = pneg %p110
        $region22: #{tpu_custom_call.1} parent=11 // pred_check_branch
          %269 = sbr.rel (%p267) target = $region24
        $region23: #{tpu_custom_call.1} parent=11 // pred_region
          _
        $region24: #{tpu_custom_call.1} parent=11 // pred_fallthru
          _
        // Predicated region
        $region25: #{tpu_custom_call.1} parent=11 // pred_check
          %p270 = pneg %p131
        $region26: #{tpu_custom_call.1} parent=11 // pred_check_branch
          %272 = sbr.rel (%p270) target = $region28
        $region27: #{tpu_custom_call.1} parent=11 // pred_region
          _
        $region28: #{tpu_custom_call.1} parent=11 // pred_fallthru
          _
        // Predicated region
        $region29: #{tpu_custom_call.1} parent=11 // pred_check
          %p273 = pneg %p152
        $region30: #{tpu_custom_call.1} parent=11 // pred_check_branch
          %275 = sbr.rel (%p273) target = $region32
        $region31: #{tpu_custom_call.1} parent=11 // pred_region
          _
        $region32: #{tpu_custom_call.1} parent=11 // pred_fallthru
          _
        // Predicated region
        $region33: #{tpu_custom_call.1} parent=11 // pred_check
          %p276 = pneg %p173
        $region34: #{tpu_custom_call.1} parent=11 // pred_check_branch
          %278 = sbr.rel (%p276) target = $region36
        $region35: #{tpu_custom_call.1} parent=11 // pred_region
          _
        $region36: #{tpu_custom_call.1} parent=11 // pred_fallthru
          _
      $region12: #{tpu_custom_call.1} parent=5 // pred_fallthru
        _
      %p279 = scmp.lt.s32.totalorder %s21, 2
      // Predicated region
      $region37: #{tpu_custom_call.1} parent=5 // pred_check
        %p280 = pneg %p279
      $region38: #{tpu_custom_call.1} parent=5 // pred_check_branch
        %282 = sbr.rel (%p280) target = $region40
      $region39: #{tpu_custom_call.1} parent=5 // pred_region
        // Predicated region
        $region41: #{tpu_custom_call.1} parent=39 // pred_check
          %p283 = pneg %p62
        $region42: #{tpu_custom_call.1} parent=39 // pred_check_branch
          %285 = sbr.rel (%p283) target = $region44
        $region43: #{tpu_custom_call.1} parent=39 // pred_region
          %s286 = sand.u32 %s52, 1
          %s287 = sand.u32 %s52, 1
          %s288 = smul.addr %s287, 16
          %s289 = scalar_lea.vmem [#allocation6], %s288
          %s290 = smul.addr %s21, 8
          %s291 = scalar_lea.vmem %s1, %s290
          // Predicated region
          $region45: #{tpu_custom_call.1} parent=43 // pred_check
            _
          $region46: #{tpu_custom_call.1} parent=43 // pred_check_branch
            %293 = sbr.rel (0) target = $region48
          $region47: #{tpu_custom_call.1} parent=43 // pred_region
            // Predicated region
            $region49: #{tpu_custom_call.1} parent=47 // pred_check
              _
            $region50: #{tpu_custom_call.1} parent=47 // pred_check_branch
              %295 = sbr.rel (0) target = $region52
            $region51: #{tpu_custom_call.1} parent=47 // pred_region
              // Predicated region
              $region64: #{tpu_custom_call.1} parent=51 // pred_check
                _
              $region65: #{tpu_custom_call.1} parent=51 // pred_check_branch
                %313 = sbr.rel (0) target = $region67
              $region66: #{tpu_custom_call.1} parent=51 // pred_region
                loop: start=0, step=1, limit=1
                $region68: #{tpu_custom_call.1} parent=66 // loop_pre_header
                  _
                $region69: #{tpu_custom_call.1} parent=66 // loop_header
                  %s315 = sphi 0, %s319
                  %p316 = scmp.ge.s32.totalorder %s315, 1
                  %s320 = sphi %s291, %s291
                  %s321 = sphi %s289, %s289
                $region70: #{tpu_custom_call.1} parent=66 // loop_header_branch
                  %318 = sbr.rel (%p316) target = $region74
                $region71: #{tpu_custom_call.1} parent=66 // loop_body
                  %v322 = vld [vmem:[%s320] sm:$0xff]
                  %323 = vst [vmem:[%s321] sm:$0xff] %v322
                  %v324 = vld [vmem:[%s320 + $0x10] sm:$0xff]
                  %325 = vst [vmem:[%s321 + $0x8] sm:$0xff] %v324
                $region72: #{tpu_custom_call.1} parent=66 // loop_footer
                  %s319 = sadd.s32 1, %s315
                $region73: #{tpu_custom_call.1} parent=66 // loop_footer_branch
                  %314 = sbr.rel target = $region69
                $region74: #{tpu_custom_call.1} parent=66 // loop_exit
                  _
              $region67: #{tpu_custom_call.1} parent=51 // pred_fallthru
                _
              // Predicated region
              $region75: #{tpu_custom_call.1} parent=51 // pred_check
                _
              $region76: #{tpu_custom_call.1} parent=51 // pred_check_branch
                %327 = sbr.rel target = $region78
              $region77: #{tpu_custom_call.1} parent=51 // pred_region
                _
              $region78: #{tpu_custom_call.1} parent=51 // pred_fallthru
                _
            $region52: #{tpu_custom_call.1} parent=47 // pred_fallthru
              _
            // Predicated region
            $region53: #{tpu_custom_call.1} parent=47 // pred_check
              _
            $region54: #{tpu_custom_call.1} parent=47 // pred_check_branch
              %297 = sbr.rel target = $region56
            $region55: #{tpu_custom_call.1} parent=47 // pred_region
              %s299 = ssub.s32 256, 1
              loop: start=0, step=1, limit=1
              $region57: #{tpu_custom_call.1} parent=55 // loop_pre_header
                _
              $region58: #{tpu_custom_call.1} parent=55 // loop_header
                %s301 = sphi 0, %s305
                %p302 = scmp.ge.s32.totalorder %s301, 1
                %s306 = sphi %s291, %s291
                %s307 = sphi %s289, %s289
              $region59: #{tpu_custom_call.1} parent=55 // loop_header_branch
                %304 = sbr.rel (%p302) target = $region63
              $region60: #{tpu_custom_call.1} parent=55 // loop_body
                %v308 = vld [vmem:[%s306] sm:%s299]
                %309 = vst [vmem:[%s307] sm:%s299] %v308
                %v310 = vld [vmem:[%s306 + $0x10] sm:%s299]
                %311 = vst [vmem:[%s307 + $0x8] sm:%s299] %v310
              $region61: #{tpu_custom_call.1} parent=55 // loop_footer
                %s305 = sadd.s32 1, %s301
              $region62: #{tpu_custom_call.1} parent=55 // loop_footer_branch
                %300 = sbr.rel target = $region58
              $region63: #{tpu_custom_call.1} parent=55 // loop_exit
                _
            $region56: #{tpu_custom_call.1} parent=47 // pred_fallthru
              _
          $region48: #{tpu_custom_call.1} parent=43 // pred_fallthru
            _
          %328 = vnop
        $region44: #{tpu_custom_call.1} parent=39 // pred_fallthru
          _
      $region40: #{tpu_custom_call.1} parent=5 // pred_fallthru
        _
      %p329 = scmp.le.s32.totalorder 1, %s21
      %p330 = scmp.lt.s32.totalorder %s21, 3
      %p331 = pnand %p329, %p330
      %p332 = pneg %p331
      // Predicated region
      $region79: #{tpu_custom_call.1} parent=5 // pred_check
        _
      $region80: #{tpu_custom_call.1} parent=5 // pred_check_branch
        %334 = sbr.rel (%p331) target = $region82
      $region81: #{tpu_custom_call.1} parent=5 // pred_region
        %s335 = ssub.s32 %s21, 1
        %s336 = sand.u32 %s55, 1
        %s337 = sand.u32 %s55, 1
        %s338 = smul.addr %s337, 16
        %s339 = scalar_lea.vmem [#allocation6], %s338
        // Predicated region
        $region83: #{tpu_custom_call.1} parent=81 // pred_check
          %p340 = pneg %p68
        $region84: #{tpu_custom_call.1} parent=81 // pred_check_branch
          %342 = sbr.rel (%p340) target = $region86
        $region85: #{tpu_custom_call.1} parent=81 // pred_region
          _
        $region86: #{tpu_custom_call.1} parent=81 // pred_fallthru
          _
        %p343 = pneg %p42
        %p344 = pneg %p39
        %s345 = sand.u32 %s55, 1
        %s346 = sand.u32 %s55, 1
        %s347 = smul.addr %s346, 16
        %s348 = scalar_lea.vmem [#allocation6], %s347
        %p349 = pneg %p68
        %p350 = pneg %p65
        %p351 = pneg %p89
        %p352 = pneg %p86
        %p353 = pneg %p110
        %p354 = pneg %p107
        %p355 = pneg %p131
        %p356 = pneg %p128
        %p357 = pneg %p152
        %p358 = pneg %p149
        %p359 = pneg %p173
        %p360 = pneg %p170
        %p361 = pneg %p194
        %p362 = pneg %p191
        %p363 = pneg %p220
        %p364 = pneg %p217
        %s365 = sand.u32 %s26, 1
        %s366 = scalar_lea.sflag [#allocation10], %s365
        %s367 = sand.u32 %s207, 1
        %s368 = smul.addr %s367, 16
        %s369 = scalar_lea.vmem [#allocation9], %s368
        %p370 = pneg %p246
        %p371 = pneg %p243
        %s372 = sand.u32 %s26, 1
        %s373 = scalar_lea.sflag [#allocation10], %s372
        %s374 = sand.u32 %s233, 1
        %s375 = smul.addr %s374, 16
        %s376 = scalar_lea.vmem [#allocation11], %s375
        %p377 = scmp.eq.s32.totalorder %s26, 0
        // Predicated region
        $region87: #{tpu_custom_call.1} parent=81 // pred_check
          %p378 = pneg %p377
        $region88: #{tpu_custom_call.1} parent=81 // pred_check_branch
          %380 = sbr.rel (%p378) target = $region90
        $region89: #{tpu_custom_call.1} parent=81 // pred_region
          %vm381 = vcmask 254976
          %382 = vst.msk [vmem:[#allocation2] sm:$0x3] %vm381, 0.0
          %383 = vst.msk [vmem:[#allocation3] sm:$0x3] %vm381, 0.0
          %384 = vst.msk [vmem:[#allocation4] sm:$0x3] %vm381, 0.0
          %vm385 = vcmask 9216
          %386 = vst.msk [vmem:[#allocation7] sm:$0x3] %vm385, 0.0
        $region90: #{tpu_custom_call.1} parent=81 // pred_fallthru
          _
        %s387 = sld [smem:[#allocation5]]
        %v388 = vld [vmem:[%s4] sm:$0xff]
        %v389 = vld [vmem:[%s4 + $0x8] sm:$0xff]
        %v390 = vld [vmem:[%s4 + $0x10] sm:$0xff]
        %v391 = vld [vmem:[%s4 + $0x18] sm:$0xff]
        %v392 = vld [vmem:[%s339] sm:$0xff]
        %v393 = vld [vmem:[%s339 + $0x8] sm:$0xff]
        %v394 = vld [vmem:[%s2] sm:$0xf]
        %v395 = vld [vmem:[%s3] sm:$0x1]
        %v397 = vperm.slane %v395, 0
        %vm399 = vcmask 31744
        %v401 = vsel %vm399, %v392, 0
        %v404 = vsel %vm399, %v393, 0
        %vm406 = vcmask 1043456
        %v408 = vsel %vm406, %v394, 0
        %410 = vmatpush.msra.mxu0 0.0
        %411 = vmatpush.msra.mxu0 0.0
        %412 = vmatpush.msra.mxu0 0.0
        %413 = vmatpush.msra.mxu0 0.0
        %414 = vmatpush.msra.mxu0 0.0
        %415 = vmatpush.msra.mxu0 0.0
        %416 = vmatpush.msra.mxu0 0.0
        %417 = vmatpush.msra.mxu0 0.0
        %418 = vmatpush.msra.mxu0 0.0
        %419 = vmatpush.msra.mxu0 0.0
        %420 = vmatpush.msra.mxu0 0.0
        %421 = vmatpush.msra.mxu0 0.0
        %422 = vmatpush.msra.mxu0 0.0
        %423 = vmatpush.msra.mxu0 0.0
        %424 = vmatpush.msra.mxu0 0.0
        %425 = vmatpush.msra.mxu0 %v408
        %426 = vmatmul.f32.gmra.mxu0 %v401
        %v427 = vpop.f32.mrf.mxu0
        %v428 = vadd.f32 %v397, %v427
        %429 = vmatmul.f32.gmra.mxu0 %v404
        %v430 = vpop.f32.mrf.mxu0
        %v431 = vadd.f32 %v397, %v430
        %432 = vdwg.mxu0
        %v433 = vld [vmem:[#allocation2] sm:$0x3]
        %v434 = vld [vmem:[#allocation3] sm:$0x3]
        %v435 = vld [vmem:[#allocation4] sm:$0x3]
        %vm436 = vcmask 261120
        %v438 = vsel %vm436, %v433, 0
        %440 = vmatpush.msra.mxu0 0.0
        %441 = vmatpush.msra.mxu0 0.0
        %442 = vmatpush.msra.mxu0 0.0
        %443 = vmatpush.msra.mxu0 0.0
        %444 = vmatpush.msra.mxu0 0.0
        %445 = vmatpush.msra.mxu0 0.0
        %446 = vmatpush.msra.mxu0 0.0
        %447 = vmatpush.msra.mxu0 0.0
        %448 = vmatpush.msra.mxu0 0.0
        %449 = vmatpush.msra.mxu0 0.0
        %450 = vmatpush.msra.mxu0 0.0
        %451 = vmatpush.msra.mxu0 0.0
        %452 = vmatpush.msra.mxu0 %v391
        %453 = vmatpush.msra.mxu0 %v390
        %454 = vmatpush.msra.mxu0 %v389
        %455 = vmatpush.msra.mxu0 %v388
        %456 = vmatmul.f32.gmra.mxu0 %v438
        %v457 = vpop.f32.mrf.mxu0
        %v458 = vadd.f32 0.0, %v457
        %459 = vdwg.mxu0
        %v461 = vrot.slane %v458, 1
        %v464 = vadd.f32 %v428, %v458
        %v465 = vadd.f32 %v431, %v461
        %v466 = vsub.f32 %v434, 1.0
        %vm467 = vcmp.gt.f32.partialorder %v466, 0.0
        %v468 = vsel %vm467, 1, 0
        %v469 = vcvt.s32.f32 %v468
        %v470 = vstv %s387
        %v471 = vmul.f32 %v470, %v434
        %v474 = vrot.slane %v465, 7
        %vm475 = vcmask 1041409
        %v476 = vsel %vm475, %v474, %v464
        %v478 = vadd.f32 %v471, %v476
        %v479 = vsub.f32 %v478, %v469
        %v480 = vsub.f32 %v479, 1.0
        %vm481 = vcmp.gt.f32.partialorder %v480, 0.0
        %v482 = vsel %vm481, 1, 0
        %v483 = vcvt.s32.f32 %v482
        %v485 = vrot.slane %v483, 1
        %vm487 = vcmask 253952
        %488 = vst.msk [vmem:[%s369] sm:$0x1] %vm487, %v483
        %489 = vst.msk [vmem:[%s369 + $0x8] sm:$0x1] %vm487, %v485
        %v491 = vrot.slane %v479, 1
        %493 = vst.msk [vmem:[%s376] sm:$0x1] %vm487, %v479
        %494 = vst.msk [vmem:[%s376 + $0x8] sm:$0x1] %vm487, %v491
        %v495 = vadd.f32 %v435, %v483
        %v496 = vsel %vm436, %v483, 0
        %498 = vmatpush.msra.mxu0 0.0
        %499 = vmatpush.msra.mxu0 0.0
        %500 = vmatpush.msra.mxu0 0.0
        %501 = vmatpush.msra.mxu0 0.0
        %502 = vmatpush.msra.mxu0 0.0
        %503 = vmatpush.msra.mxu0 0.0
        %504 = vmatpush.msra.mxu0 0.0
        %505 = vmatpush.msra.mxu0 0.0
        %506 = vmatpush.msra.mxu0 0.0
        %507 = vmatpush.msra.mxu0 0.0
        %508 = vmatpush.msra.mxu0 0.0
        %509 = vmatpush.msra.mxu0 0.0
        %510 = vmatpush.msra.mxu0 %v391
        %511 = vmatpush.msra.mxu0 %v390
        %512 = vmatpush.msra.mxu0 %v389
        %513 = vmatpush.msra.mxu0 %v388
        %514 = vmatmul.f32.gmra.mxu0 %v496
        %v515 = vpop.f32.mrf.mxu0
        %v516 = vadd.f32 0.0, %v515
        %517 = vdwg.mxu0
        %v519 = vrot.slane %v516, 7
        %v522 = vadd.f32 %v428, %v519
        %v523 = vadd.f32 %v431, %v516
        %v524 = vmul.f32 %v470, %v479
        %v527 = vrot.slane %v522, 1
        %v528 = vsel %vm475, %v523, %v527
        %v530 = vadd.f32 %v524, %v528
        %v531 = vsub.f32 %v530, %v483
        %v532 = vsub.f32 %v531, 1.0
        %vm533 = vcmp.gt.f32.partialorder %v532, 0.0
        %v534 = vsel %vm533, 1, 0
        %v535 = vcvt.s32.f32 %v534
        %v537 = vrot.slane %v535, 1
        %539 = vst.msk [vmem:[%s369 + $0x1] sm:$0x1] %vm487, %v535
        %540 = vst.msk [vmem:[%s369 + $0x9] sm:$0x1] %vm487, %v537
        %v542 = vrot.slane %v531, 1
        %544 = vst.msk [vmem:[%s376 + $0x1] sm:$0x1] %vm487, %v531
        %545 = vst.msk [vmem:[%s376 + $0x9] sm:$0x1] %vm487, %v542
        %v546 = vadd.f32 %v495, %v535
        %v547 = vsel %vm436, %v535, 0
        %549 = vmatpush.msra.mxu0 0.0
        %550 = vmatpush.msra.mxu0 0.0
        %551 = vmatpush.msra.mxu0 0.0
        %552 = vmatpush.msra.mxu0 0.0
        %553 = vmatpush.msra.mxu0 0.0
        %554 = vmatpush.msra.mxu0 0.0
        %555 = vmatpush.msra.mxu0 0.0
        %556 = vmatpush.msra.mxu0 0.0
        %557 = vmatpush.msra.mxu0 0.0
        %558 = vmatpush.msra.mxu0 0.0
        %559 = vmatpush.msra.mxu0 0.0
        %560 = vmatpush.msra.mxu0 0.0
        %561 = vmatpush.msra.mxu0 %v391
        %562 = vmatpush.msra.mxu0 %v390
        %563 = vmatpush.msra.mxu0 %v389
        %564 = vmatpush.msra.mxu0 %v388
        %565 = vmatmul.f32.gmra.mxu0 %v547
        %v566 = vpop.f32.mrf.mxu0
        %v567 = vadd.f32 0.0, %v566
        %568 = vdwg.mxu0
        %v570 = vrot.slane %v567, 6
        %v571 = vrot.slane %v567, 7
        %v574 = vadd.f32 %v428, %v570
        %v575 = vadd.f32 %v431, %v571
        %v576 = vmul.f32 %v470, %v531
        %v579 = vrot.slane %v574, 2
        %v580 = vrot.slane %v575, 1
        %v581 = vsel %vm475, %v580, %v579
        %v583 = vadd.f32 %v576, %v581
        %v584 = vsub.f32 %v583, %v535
        %v585 = vsub.f32 %v584, 1.0
        %vm586 = vcmp.gt.f32.partialorder %v585, 0.0
        %v587 = vsel %vm586, 1, 0
        %v588 = vcvt.s32.f32 %v587
        %v590 = vrot.slane %v588, 1
        %592 = vst.msk [vmem:[%s369 + $0x2] sm:$0x1] %vm487, %v588
        %593 = vst.msk [vmem:[%s369 + $0xa] sm:$0x1] %vm487, %v590
        %v595 = vrot.slane %v584, 1
        %597 = vst.msk [vmem:[%s376 + $0x2] sm:$0x1] %vm487, %v584
        %598 = vst.msk [vmem:[%s376 + $0xa] sm:$0x1] %vm487, %v595
        %v599 = vadd.f32 %v546, %v588
        %v600 = vsel %vm436, %v588, 0
        %602 = vmatpush.msra.mxu0 0.0
        %603 = vmatpush.msra.mxu0 0.0
        %604 = vmatpush.msra.mxu0 0.0
        %605 = vmatpush.msra.mxu0 0.0
        %606 = vmatpush.msra.mxu0 0.0
        %607 = vmatpush.msra.mxu0 0.0
        %608 = vmatpush.msra.mxu0 0.0
        %609 = vmatpush.msra.mxu0 0.0
        %610 = vmatpush.msra.mxu0 0.0
        %611 = vmatpush.msra.mxu0 0.0
        %612 = vmatpush.msra.mxu0 0.0
        %613 = vmatpush.msra.mxu0 0.0
        %614 = vmatpush.msra.mxu0 %v391
        %615 = vmatpush.msra.mxu0 %v390
        %616 = vmatpush.msra.mxu0 %v389
        %617 = vmatpush.msra.mxu0 %v388
        %618 = vmatmul.f32.gmra.mxu0 %v600
        %v619 = vpop.f32.mrf.mxu0
        %v620 = vadd.f32 0.0, %v619
        %621 = vdwg.mxu0
        %v623 = vrot.slane %v620, 5
        %v624 = vrot.slane %v620, 6
        %v627 = vadd.f32 %v428, %v623
        %v628 = vadd.f32 %v431, %v624
        %v629 = vmul.f32 %v470, %v584
        %v632 = vrot.slane %v627, 3
        %v633 = vrot.slane %v628, 2
        %v634 = vsel %vm475, %v633, %v632
        %v636 = vadd.f32 %v629, %v634
        %v637 = vsub.f32 %v636, %v588
        %v638 = vsub.f32 %v637, 1.0
        %vm639 = vcmp.gt.f32.partialorder %v638, 0.0
        %v640 = vsel %vm639, 1, 0
        %v641 = vcvt.s32.f32 %v640
        %v643 = vrot.slane %v641, 1
        %645 = vst.msk [vmem:[%s369 + $0x3] sm:$0x1] %vm487, %v641
        %646 = vst.msk [vmem:[%s369 + $0xb] sm:$0x1] %vm487, %v643
        %v648 = vrot.slane %v637, 1
        %650 = vst.msk [vmem:[%s376 + $0x3] sm:$0x1] %vm487, %v637
        %651 = vst.msk [vmem:[%s376 + $0xb] sm:$0x1] %vm487, %v648
        %v652 = vadd.f32 %v599, %v641
        %v653 = vsel %vm436, %v641, 0
        %655 = vmatpush.msra.mxu0 0.0
        %656 = vmatpush.msra.mxu0 0.0
        %657 = vmatpush.msra.mxu0 0.0
        %658 = vmatpush.msra.mxu0 0.0
        %659 = vmatpush.msra.mxu0 0.0
        %660 = vmatpush.msra.mxu0 0.0
        %661 = vmatpush.msra.mxu0 0.0
        %662 = vmatpush.msra.mxu0 0.0
        %663 = vmatpush.msra.mxu0 0.0
        %664 = vmatpush.msra.mxu0 0.0
        %665 = vmatpush.msra.mxu0 0.0
        %666 = vmatpush.msra.mxu0 0.0
        %667 = vmatpush.msra.mxu0 %v391
        %668 = vmatpush.msra.mxu0 %v390
        %669 = vmatpush.msra.mxu0 %v389
        %670 = vmatpush.msra.mxu0 %v388
        %671 = vmatmul.f32.gmra.mxu0 %v653
        %v672 = vpop.f32.mrf.mxu0
        %v673 = vadd.f32 0.0, %v672
        %674 = vdwg.mxu0
        %v676 = vrot.slane %v673, 4
        %v677 = vrot.slane %v673, 5
        %v680 = vadd.f32 %v428, %v676
        %v681 = vadd.f32 %v431, %v677
        %v682 = vmul.f32 %v470, %v637
        %v685 = vrot.slane %v680, 4
        %v686 = vrot.slane %v681, 3
        %v687 = vsel %vm475, %v686, %v685
        %v689 = vadd.f32 %v682, %v687
        %v690 = vsub.f32 %v689, %v641
        %v691 = vsub.f32 %v690, 1.0
        %vm692 = vcmp.gt.f32.partialorder %v691, 0.0
        %v693 = vsel %vm692, 1, 0
        %v694 = vcvt.s32.f32 %v693
        %v696 = vrot.slane %v694, 1
        %698 = vst.msk [vmem:[%s369 + $0x4] sm:$0x1] %vm487, %v694
        %699 = vst.msk [vmem:[%s369 + $0xc] sm:$0x1] %vm487, %v696
        %v701 = vrot.slane %v690, 1
        %703 = vst.msk [vmem:[%s376 + $0x4] sm:$0x1] %vm487, %v690
        %704 = vst.msk [vmem:[%s376 + $0xc] sm:$0x1] %vm487, %v701
        %v705 = vadd.f32 %v652, %v694
        %v706 = vsel %vm436, %v694, 0
        %708 = vmatpush.msra.mxu0 0.0
        %709 = vmatpush.msra.mxu0 0.0
        %710 = vmatpush.msra.mxu0 0.0
        %711 = vmatpush.msra.mxu0 0.0
        %712 = vmatpush.msra.mxu0 0.0
        %713 = vmatpush.msra.mxu0 0.0
        %714 = vmatpush.msra.mxu0 0.0
        %715 = vmatpush.msra.mxu0 0.0
        %716 = vmatpush.msra.mxu0 0.0
        %717 = vmatpush.msra.mxu0 0.0
        %718 = vmatpush.msra.mxu0 0.0
        %719 = vmatpush.msra.mxu0 0.0
        %720 = vmatpush.msra.mxu0 %v391
        %721 = vmatpush.msra.mxu0 %v390
        %722 = vmatpush.msra.mxu0 %v389
        %723 = vmatpush.msra.mxu0 %v388
        %724 = vmatmul.f32.gmra.mxu0 %v706
        %v725 = vpop.f32.mrf.mxu0
        %v726 = vadd.f32 0.0, %v725
        %727 = vdwg.mxu0
        %v729 = vrot.slane %v726, 3
        %v730 = vrot.slane %v726, 4
        %v733 = vadd.f32 %v428, %v729
        %v734 = vadd.f32 %v431, %v730
        %v735 = vmul.f32 %v470, %v690
        %v738 = vrot.slane %v733, 5
        %v739 = vrot.slane %v734, 4
        %v740 = vsel %vm475, %v739, %v738
        %v742 = vadd.f32 %v735, %v740
        %v743 = vsub.f32 %v742, %v694
        %v744 = vsub.f32 %v743, 1.0
        %vm745 = vcmp.gt.f32.partialorder %v744, 0.0
        %v746 = vsel %vm745, 1, 0
        %v747 = vcvt.s32.f32 %v746
        %v749 = vrot.slane %v747, 1
        %751 = vst.msk [vmem:[%s369 + $0x5] sm:$0x1] %vm487, %v747
        %752 = vst.msk [vmem:[%s369 + $0xd] sm:$0x1] %vm487, %v749
        %v754 = vrot.slane %v743, 1
        %756 = vst.msk [vmem:[%s376 + $0x5] sm:$0x1] %vm487, %v743
        %757 = vst.msk [vmem:[%s376 + $0xd] sm:$0x1] %vm487, %v754
        %v758 = vadd.f32 %v705, %v747
        %v759 = vsel %vm436, %v747, 0
        %761 = vmatpush.msra.mxu0 0.0
        %762 = vmatpush.msra.mxu0 0.0
        %763 = vmatpush.msra.mxu0 0.0
        %764 = vmatpush.msra.mxu0 0.0
        %765 = vmatpush.msra.mxu0 0.0
        %766 = vmatpush.msra.mxu0 0.0
        %767 = vmatpush.msra.mxu0 0.0
        %768 = vmatpush.msra.mxu0 0.0
        %769 = vmatpush.msra.mxu0 0.0
        %770 = vmatpush.msra.mxu0 0.0
        %771 = vmatpush.msra.mxu0 0.0
        %772 = vmatpush.msra.mxu0 0.0
        %773 = vmatpush.msra.mxu0 %v391
        %774 = vmatpush.msra.mxu0 %v390
        %775 = vmatpush.msra.mxu0 %v389
        %776 = vmatpush.msra.mxu0 %v388
        %777 = vmatmul.f32.gmra.mxu0 %v759
        %v778 = vpop.f32.mrf.mxu0
        %v779 = vadd.f32 0.0, %v778
        %780 = vdwg.mxu0
        %v782 = vrot.slane %v779, 2
        %v783 = vrot.slane %v779, 3
        %v786 = vadd.f32 %v428, %v782
        %v787 = vadd.f32 %v431, %v783
        %v788 = vmul.f32 %v470, %v743
        %v791 = vrot.slane %v786, 6
        %v792 = vrot.slane %v787, 5
        %v793 = vsel %vm475, %v792, %v791
        %v795 = vadd.f32 %v788, %v793
        %v796 = vsub.f32 %v795, %v747
        %v797 = vsub.f32 %v796, 1.0
        %vm798 = vcmp.gt.f32.partialorder %v797, 0.0
        %v799 = vsel %vm798, 1, 0
        %v800 = vcvt.s32.f32 %v799
        %v802 = vrot.slane %v800, 1
        %804 = vst.msk [vmem:[%s369 + $0x6] sm:$0x1] %vm487, %v800
        %805 = vst.msk [vmem:[%s369 + $0xe] sm:$0x1] %vm487, %v802
        %v807 = vrot.slane %v796, 1
        %809 = vst.msk [vmem:[%s376 + $0x6] sm:$0x1] %vm487, %v796
        %810 = vst.msk [vmem:[%s376 + $0xe] sm:$0x1] %vm487, %v807
        %v811 = vadd.f32 %v758, %v800
        %v812 = vsel %vm436, %v800, 0
        %814 = vmatpush.msra.mxu0 0.0
        %815 = vmatpush.msra.mxu0 0.0
        %816 = vmatpush.msra.mxu0 0.0
        %817 = vmatpush.msra.mxu0 0.0
        %818 = vmatpush.msra.mxu0 0.0
        %819 = vmatpush.msra.mxu0 0.0
        %820 = vmatpush.msra.mxu0 0.0
        %821 = vmatpush.msra.mxu0 0.0
        %822 = vmatpush.msra.mxu0 0.0
        %823 = vmatpush.msra.mxu0 0.0
        %824 = vmatpush.msra.mxu0 0.0
        %825 = vmatpush.msra.mxu0 0.0
        %826 = vmatpush.msra.mxu0 %v391
        %827 = vmatpush.msra.mxu0 %v390
        %828 = vmatpush.msra.mxu0 %v389
        %829 = vmatpush.msra.mxu0 %v388
        %830 = vmatmul.f32.gmra.mxu0 %v812
        %v831 = vpop.f32.mrf.mxu0
        %v832 = vadd.f32 0.0, %v831
        %833 = vdwg.mxu0
        %v835 = vrot.slane %v832, 1
        %v836 = vrot.slane %v832, 2
        %v839 = vadd.f32 %v428, %v835
        %v840 = vadd.f32 %v431, %v836
        %v841 = vmul.f32 %v470, %v796
        %v844 = vrot.slane %v839, 7
        %v845 = vrot.slane %v840, 6
        %v846 = vsel %vm475, %v845, %v844
        %v848 = vadd.f32 %v841, %v846
        %v849 = vsub.f32 %v848, %v800
        %v850 = vsub.f32 %v849, 1.0
        %vm851 = vcmp.gt.f32.partialorder %v850, 0.0
        %v852 = vsel %vm851, 1, 0
        %v853 = vcvt.s32.f32 %v852
        %v855 = vrot.slane %v853, 1
        %857 = vst.msk [vmem:[%s369 + $0x7] sm:$0x1] %vm487, %v853
        %858 = vst.msk [vmem:[%s369 + $0xf] sm:$0x1] %vm487, %v855
        %v860 = vrot.slane %v849, 1
        %862 = vst.msk [vmem:[%s376 + $0x7] sm:$0x1] %vm487, %v849
        %863 = vst.msk [vmem:[%s376 + $0xf] sm:$0x1] %vm487, %v860
        %v864 = vadd.f32 %v811, %v853
        %vm865 = vcmask 254976
        %866 = vst.msk [vmem:[#allocation2] sm:$0x3] %vm865, %v853
        %867 = vst.msk [vmem:[#allocation3] sm:$0x3] %vm865, %v849
        %868 = vst.msk [vmem:[#allocation4] sm:$0x3] %vm865, %v864
        %p869 = scmp.eq.s32.totalorder %s26, 1
        // Predicated region
        $region91: #{tpu_custom_call.1} parent=81 // pred_check
          %p870 = pneg %p869
        $region92: #{tpu_custom_call.1} parent=81 // pred_check_branch
          %872 = sbr.rel (%p870) target = $region94
        $region93: #{tpu_custom_call.1} parent=81 // pred_region
          %v873 = vld [vmem:[%s5] sm:$0xff]
          %v874 = vld [vmem:[%s5 + $0x8] sm:$0xff]
          %v875 = vld [vmem:[%s5 + $0x10] sm:$0xff]
          %v876 = vld [vmem:[%s5 + $0x18] sm:$0xff]
          %v877 = vld [vmem:[%s6] sm:$0x1]
          %v878 = vmul.f32 %v877, 16.0
          %v880 = vperm.slane %v878, 0
          %v883 = vsel %vm436, %v864, 0
          %885 = vmatpush.msra.mxu0 0.0
          %886 = vmatpush.msra.mxu0 0.0
          %887 = vmatpush.msra.mxu0 0.0
          %888 = vmatpush.msra.mxu0 0.0
          %889 = vmatpush.msra.mxu0 0.0
          %890 = vmatpush.msra.mxu0 0.0
          %891 = vmatpush.msra.mxu0 0.0
          %892 = vmatpush.msra.mxu0 0.0
          %893 = vmatpush.msra.mxu0 0.0
          %894 = vmatpush.msra.mxu0 0.0
          %895 = vmatpush.msra.mxu0 0.0
          %896 = vmatpush.msra.mxu0 0.0
          %897 = vmatpush.msra.mxu0 %v876
          %898 = vmatpush.msra.mxu0 %v875
          %899 = vmatpush.msra.mxu0 %v874
          %900 = vmatpush.msra.mxu0 %v873
          %901 = vmatmul.f32.gmra.mxu0 %v883
          %v902 = vpop.f32.mrf.mxu0
          %v903 = vadd.f32 %v880, %v902
          %904 = vdwg.mxu0
          %vm905 = vcmask 9216
          %v906 = vsel %vm905, %v903, -inf
          %907 = vmax.xlane.f32.xlu0 %v906
          %v908 = vpop.xlane.xlu0 %907
          %v909 = vsub.f32 %v903, %v908
          %v910 = vmul.f32 %v909, 1.442695
          %v911 = vpow.pop %v910
          %v912 = vsel %vm905, %v911, 0.0
          %913 = vadd.xlane.f32.xlu0 %v912
          %v914 = vpop.xlane.xlu0 %913
          %v915 = vrcp.pop %v914
          %v916 = vmul.f32 %v914, %v915
          %v917 = vsub.f32 1.0, %v916
          %v918 = vmul.f32 %v915, %v917
          %v919 = vadd.f32 %v915, %v918
          %vm920 = vweird.f32 %v914
          %vm921 = vweird.f32 %v915
          %vm922 = vmor %vm920, %vm921
          %v923 = vsel %vm922, %v915, %v919
          %v924 = vand.u32 2147483647, %v914
          %vm925 = vcmp.eq.f32.partialorder %v924, 8.507059e+37
          %v926 = vand.u32 %v914, 2147483648
          %v927 = vor.u32 1.1754944e-38, %v926
          %v928 = vsel %vm925, %v927, %v923
          %v929 = vmul.f32 %v911, %v928
          %930 = vst.msk [vmem:[#allocation7] sm:$0x3] %vm905, %v929
        $region94: #{tpu_custom_call.1} parent=81 // pred_fallthru
          _
        %s931 = sand.u32 %s26, 1
        %s932 = scalar_lea.sflag [#allocation10], %s931
        %s933 = sand.u32 %s207, 1
        %s934 = smul.addr %s933, 16
        %s935 = scalar_lea.vmem [#allocation9], %s934
        %s936 = sand.u32 %s26, 1
        %s937 = scalar_lea.sflag [#allocation10], %s936
        %s938 = sand.u32 %s233, 1
        %s939 = smul.addr %s938, 16
        %s940 = scalar_lea.vmem [#allocation11], %s939
        // Predicated region
        $region95: #{tpu_custom_call.1} parent=81 // pred_check
          %p941 = pneg %p191
        $region96: #{tpu_custom_call.1} parent=81 // pred_check_branch
          %943 = sbr.rel (%p941) target = $region98
        $region97: #{tpu_custom_call.1} parent=81 // pred_region
          %945 = vsyncadd [#allocation8], 0
          %s947 = sshll.u32 [#allocation7], 4
          %s948 = int_to_ptr.vmem [resolvable:$true] %s947
          %s949 = sshll.u32 %s7, 4
          %s950 = int_to_ptr.hbm [resolvable:$true] %s949
          %952 = dma.vmem_to_hbm [thread:$0]  %s948, 32, %s950, [#allocation8]
        $region98: #{tpu_custom_call.1} parent=81 // pred_fallthru
          _
        // Predicated region
        $region99: #{tpu_custom_call.1} parent=81 // pred_check
          %p953 = pneg %p217
        $region100: #{tpu_custom_call.1} parent=81 // pred_check_branch
          %955 = sbr.rel (%p953) target = $region102
        $region101: #{tpu_custom_call.1} parent=81 // pred_region
          %957 = vsyncadd %s932, 0
          %s958 = smul.addr %s26, 8
          %s959 = scalar_lea.hbm %s8, %s958
          %s960 = sshll.u32 %s935, 4
          %s961 = int_to_ptr.vmem [resolvable:$true] %s960
          %s962 = sshll.u32 %s959, 4
          %s963 = int_to_ptr.hbm [resolvable:$true] %s962
          %968 = dma.vmem_to_hbm [thread:$0]  %s961, 256, %s963, %s932, 128, 256, 8
        $region102: #{tpu_custom_call.1} parent=81 // pred_fallthru
          _
        // Predicated region
        $region103: #{tpu_custom_call.1} parent=81 // pred_check
          %p969 = pneg %p243
        $region104: #{tpu_custom_call.1} parent=81 // pred_check_branch
          %971 = sbr.rel (%p969) target = $region106
        $region105: #{tpu_custom_call.1} parent=81 // pred_region
          %973 = vsyncadd %s937, 0
          %s974 = smul.addr %s26, 8
          %s975 = scalar_lea.hbm %s9, %s974
          %s976 = sshll.u32 %s940, 4
          %s977 = int_to_ptr.vmem [resolvable:$true] %s976
          %s978 = sshll.u32 %s975, 4
          %s979 = int_to_ptr.hbm [resolvable:$true] %s978
          %984 = dma.vmem_to_hbm [thread:$0]  %s977, 256, %s979, %s937, 128, 256, 8
        $region106: #{tpu_custom_call.1} parent=81 // pred_fallthru
          _
        // Predicated region
        $region107: #{tpu_custom_call.1} parent=81 // pred_check
          %p985 = pneg %p191
        $region108: #{tpu_custom_call.1} parent=81 // pred_check_branch
          %987 = sbr.rel (%p985) target = $region110
        $region109: #{tpu_custom_call.1} parent=81 // pred_region
          %989 = dma.done [#allocation8], 32
        $region110: #{tpu_custom_call.1} parent=81 // pred_fallthru
          _
      $region82: #{tpu_custom_call.1} parent=5 // pred_fallthru
        _
      %p990 = scmp.le.s32.totalorder 2, %s21
      // Predicated region
      $region111: #{tpu_custom_call.1} parent=5 // pred_check
        %p991 = pneg %p990
      $region112: #{tpu_custom_call.1} parent=5 // pred_check_branch
        %993 = sbr.rel (%p991) target = $region114
      $region113: #{tpu_custom_call.1} parent=5 // pred_region
        %s994 = ssub.s32 %s21, 2
        // Predicated region
        $region115: #{tpu_custom_call.1} parent=113 // pred_check
          %p995 = pneg %p223
        $region116: #{tpu_custom_call.1} parent=113 // pred_check_branch
          %997 = sbr.rel (%p995) target = $region118
        $region117: #{tpu_custom_call.1} parent=113 // pred_region
          %s998 = sand.u32 %s27, 1
          %s999 = scalar_lea.sflag [#allocation10], %s998
          %s1000 = sand.u32 %s208, 1
          %s1001 = smul.addr %s1000, 16
          %s1002 = scalar_lea.vmem [#allocation9], %s1001
          %1004 = dma.done %s999, 256
        $region118: #{tpu_custom_call.1} parent=113 // pred_fallthru
          _
        // Predicated region
        $region119: #{tpu_custom_call.1} parent=113 // pred_check
          %p1005 = pneg %p249
        $region120: #{tpu_custom_call.1} parent=113 // pred_check_branch
          %1007 = sbr.rel (%p1005) target = $region122
        $region121: #{tpu_custom_call.1} parent=113 // pred_region
          %s1008 = sand.u32 %s27, 1
          %s1009 = scalar_lea.sflag [#allocation10], %s1008
          %s1010 = sand.u32 %s234, 1
          %s1011 = smul.addr %s1010, 16
          %s1012 = scalar_lea.vmem [#allocation11], %s1011
          %1014 = dma.done %s1009, 256
        $region122: #{tpu_custom_call.1} parent=113 // pred_fallthru
          _
      $region114: #{tpu_custom_call.1} parent=5 // pred_fallthru
        _
    $region6: #{tpu_custom_call.1} parent=1 // loop_footer
      %s25 = sadd.s32 1, %s21
    $region7: #{tpu_custom_call.1} parent=1 // loop_footer_branch
      %20 = sbr.rel target = $region3
    $region8: #{tpu_custom_call.1} parent=1 // loop_exit
      _
    %1015 = vsyncpa [#allocation8], 1
    %s1016 = scalar_lea.sflag [#allocation8], 1
    %1017 = vsyncpa %s1016, 1
    %1018 = vsyncpa [#allocation10], 1
    %s1019 = scalar_lea.sflag [#allocation10], 1
    %1020 = vsyncpa %s1019, 1

</llo_original>
